<compile_context>
chip_gen: v5e
topology: v5e:2x2
jax: 0.10.0
libtpu: 0.0.40
codegen_flags: <defaults>
</compile_context>

<pallas_src>
import functools
import math

import jax
import jax.numpy as jnp
import numpy as np
from jax.experimental import pallas as pl
from jax.experimental.pallas import tpu as pltpu


# ------------------------------ fused kernel ------------------------------- #

def _decoder_kernel(*refs, n_dense, n_lstm, num_dir, T, H):
    """Fused decoder forward.

    refs layout:
      x (Bp, latent),
      [dense w_t (Din,Dout), dense b (1,Dout)] * n_dense,
      [lstm w_ih_t (Din_l,4H), w_hh_t (H,4H), b (1,4H)] * (n_lstm * num_dir),
      w_final_t_padded (Hdir,P_pad), b_final_padded (1,P_pad),
      o_ref (T*Bp, P_pad)            -- time-major rows, lane-dense.
    """
    idx = 0
    x_ref = refs[idx]; idx += 1
    dense_ws = []
    for _ in range(n_dense):
        dense_ws.append((refs[idx], refs[idx + 1]))
        idx += 2
    lstm_ws = []
    for _ in range(n_lstm):
        dirs = []
        for _ in range(num_dir):
            dirs.append((refs[idx], refs[idx + 1], refs[idx + 2]))
            idx += 3
        lstm_ws.append(dirs)
    wf_ref, bf_ref = refs[idx], refs[idx + 1]; idx += 2
    o_ref = refs[idx]

    # -------- dense stack (Linear + ReLU), time-invariant -------------------
    h = x_ref[...]
    for w_ref, b_ref in dense_ws:
        h = jnp.maximum(
            jnp.dot(h, w_ref[...], preferred_element_type=jnp.float32)
            + b_ref[...], 0.0)
    Bp = h.shape[0]

    def lstm_cell(pre, c_prev):
        # pre: (Bp, 4H); PyTorch gate order i, f, g, o.
        sg = jax.nn.sigmoid(pre)               # one full-vreg EUP pass
        i_g = sg[:, 0:H]
        f_g = sg[:, H:2 * H]
        o_g = sg[:, 3 * H:4 * H]
        g_g = jnp.tanh(pre[:, 2 * H:3 * H])    # tanh only on the g lanes
        # TODO(synk): if the bundle dump shows per-slice lane copies on the
        # serial chain, realign gates with pltpu.roll instead of slicing.
        c_new = f_g * c_prev + i_g * g_g
        h_new = o_g * jnp.tanh(c_new)
        return h_new, c_new

    # -------- multi-layer (optionally bidirectional) LSTM -------------------
    # Hidden states stay as traced values (vregs); no VMEM scratch round-trips.
    # prev_dirs[d][t] = hidden state of direction d at absolute time t.
    prev_dirs = None
    for layer in range(n_lstm):
        cur_dirs = []
        for d in range(num_dir):
            wih_ref, whh_ref, b_ref = lstm_ws[layer][d]
            wih = wih_ref[...]
            whh = whh_ref[...]
            b = b_ref[...]
            if layer == 0:
                # Input is the same (Bp, D) vector every step -> hoist once.
                xp_shared = (jnp.dot(h, wih,
                                     preferred_element_type=jnp.float32) + b)
                xp_all = None
            else:
                # Batch ALL T input projections into one matmul (M = T*Bp).
                if num_dir == 1:
                    x_stack = jnp.concatenate(prev_dirs[0], axis=0)  # (T*Bp,H)
                    xp_all = (jnp.dot(x_stack, wih,
                                      preferred_element_type=jnp.float32) + b)
                else:
                    # Split-weight sum instead of lane-dim concat.
                    xf = jnp.concatenate(prev_dirs[0], axis=0)
                    xb = jnp.concatenate(prev_dirs[1], axis=0)
                    xp_all = (jnp.dot(xf, wih[0:H, :],
                                      preferred_element_type=jnp.float32)
                              + jnp.dot(xb, wih[H:2 * H, :],
                                        preferred_element_type=jnp.float32)
                              + b)
                xp_shared = None

            h_t = jnp.zeros((Bp, H), jnp.float32)
            c_t = jnp.zeros((Bp, H), jnp.float32)
            outs = [None] * T
            for step in range(T):                    # static, fully unrolled
                tt = step if d == 0 else T - 1 - step
                if layer == 0:
                    xp = xp_shared
                else:
                    xp = xp_all[tt * Bp:(tt + 1) * Bp, :]   # sublane-aligned
                # Only the h_t @ W_hh matmul remains on the recurrent chain.
                # TODO(synk): v5e micro-opt - hold whh in MXU weight regs via
                # pltpu.matmul_push_rhs / matmul_acc_lhs across the T loop.
                pre = xp + jnp.dot(h_t, whh,
                                   preferred_element_type=jnp.float32)
                h_t, c_t = lstm_cell(pre, c_t)
                outs[tt] = h_t
            cur_dirs.append(outs)
        prev_dirs = cur_dirs

    # -------- final dense: ONE matmul, ONE lane-dense store ------------------
    wf = wf_ref[...]
    bf = bf_ref[...]
    if num_dir == 1:
        x_last = jnp.concatenate(prev_dirs[0], axis=0)        # (T*Bp, H)
        y = jnp.dot(x_last, wf, preferred_element_type=jnp.float32) + bf
    else:
        xf = jnp.concatenate(prev_dirs[0], axis=0)
        xb = jnp.concatenate(prev_dirs[1], axis=0)
        y = (jnp.dot(xf, wf[0:H, :], preferred_element_type=jnp.float32)
             + jnp.dot(xb, wf[H:2 * H, :], preferred_element_type=jnp.float32)
             + bf)
    o_ref[...] = y                                            # (T*Bp, P_pad)


# ------------------------------ wrapper ------------------------------------ #

def decoder_forward(params, x, *, sequence_length, pose_dim, rnn_layer_size,
                    rnn_bidirectional):
    """x: (batch, latent_dim) -> (batch, sequence_length, pose_dim)."""
    B = x.shape[0]
    T = sequence_length
    H = rnn_layer_size
    num_dir = 2 if rnn_bidirectional else 1
    Hdir = H * num_dir
    P_pad = pl.cdiv(pose_dim, 128) * 128      # lane-dense output width

    # Pad batch to a full sublane group (8) so vector/MXU ops are unmasked.
    Bp = max(8, pl.cdiv(B, 8) * 8)
    x_p = jnp.zeros((Bp, x.shape[1]), jnp.float32).at[:B].set(x)

    # Pre-transpose / pad / fold-bias parameters (lane-natural MXU layouts).
    inputs = [x_p]
    for w, b in params["dense"]:
        inputs.append(w.T)                               # (Din, Dout)
        inputs.append(b.reshape(1, -1))                  # (1, Dout)
    for dirs in params["lstm"]:
        for d in dirs:
            inputs.append(d["w_ih"].T)                   # (Din_l, 4H)
            inputs.append(d["w_hh"].T)                   # (H, 4H)
            inputs.append((d["b_ih"] + d["b_hh"]).reshape(1, 4 * H))
    w_f, b_f = params["final"]
    wf_pad = jnp.zeros((Hdir, P_pad), jnp.float32).at[:, :pose_dim].set(w_f.T)
    bf_pad = jnp.zeros((1, P_pad), jnp.float32).at[:, :pose_dim].set(
        b_f.reshape(1, -1))
    inputs += [wf_pad, bf_pad]

    n_dense = len(params["dense"])
    n_lstm = len(params["lstm"])

    def full_spec(a):
        nd = a.ndim
        return pl.BlockSpec(a.shape, lambda *_: (0,) * nd)

    kernel = functools.partial(
        _decoder_kernel, n_dense=n_dense, n_lstm=n_lstm,
        num_dir=num_dir, T=T, H=H)

    out = pl.pallas_call(
        kernel,
        out_shape=jax.ShapeDtypeStruct((T * Bp, P_pad), jnp.float32),
        in_specs=[full_spec(a) for a in inputs],
        out_specs=pl.BlockSpec((T * Bp, P_pad), lambda *_: (0, 0)),
        compiler_params=pltpu.CompilerParams(
            vmem_limit_bytes=16 * 1024 * 1024),
    )(*inputs)

    # (T*Bp, P_pad) time-major -> (B, T, pose_dim) batch-first like PyTorch.
    out = out.reshape(T, Bp, P_pad)[:, :B, :pose_dim]
    return jnp.transpose(out, (1, 0, 2))


# --------------------------- parameter init -------------------------------- #

def init_decoder_params(key, sequence_length, pose_dim, latent_dim,
                        rnn_layer_count, rnn_layer_size, rnn_bidirectional,
                        dense_layer_sizes):
    """Deterministic parameter init mirroring PyTorch default initializers."""
    params = {"dense": [], "lstm": [], "final": None}

    def uniform(key, shape, bound):
        return jax.random.uniform(key, shape, jnp.float32, -bound, bound)

    in_dim = latent_dim
    for out_dim in dense_layer_sizes:
        key, k1, k2 = jax.random.split(key, 3)
        bound = 1.0 / math.sqrt(in_dim)
        params["dense"].append(
            (uniform(k1, (out_dim, in_dim), bound),
             uniform(k2, (out_dim,), bound)))
        in_dim = out_dim

    num_dir = 2 if rnn_bidirectional else 1
    H = rnn_layer_size
    bound = 1.0 / math.sqrt(H)
    lstm_in = dense_layer_sizes[-1]
    for layer in range(rnn_layer_count):
        layer_in = lstm_in if layer == 0 else H * num_dir
        dirs = []
        for _ in range(num_dir):
            key, k1, k2, k3, k4 = jax.random.split(key, 5)
            dirs.append({
                "w_ih": uniform(k1, (4 * H, layer_in), bound),
                "w_hh": uniform(k2, (4 * H, H), bound),
                "b_ih": uniform(k3, (4 * H,), bound),
                "b_hh": uniform(k4, (4 * H,), bound),
            })
        params["lstm"].append(dirs)

    final_in = H * num_dir
    key, k1, k2 = jax.random.split(key, 3)
    bound = 1.0 / math.sqrt(final_in)
    params["final"] = (uniform(k1, (pose_dim, final_in), bound),
                       uniform(k2, (pose_dim,), bound))
    return params


# --------------------------- pure-JAX reference ----------------------------- #

def decoder_reference(params, x, *, sequence_length, rnn_layer_size,
                      rnn_bidirectional):
    h = x
    for w, b in params["dense"]:
        h = jnp.maximum(h @ w.T + b, 0.0)
    B = x.shape[0]
    T = sequence_length
    H = rnn_layer_size
    inp = jnp.broadcast_to(h[:, None, :], (B, T, h.shape[-1]))

    def run_dir(x_seq, p):
        def cell(carry, x_t):
            h_prev, c_prev = carry
            g = (x_t @ p["w_ih"].T + p["b_ih"]
                 + h_prev @ p["w_hh"].T + p["b_hh"])
            i = jax.nn.sigmoid(g[:, :H])
            f = jax.nn.sigmoid(g[:, H:2 * H])
            gg = jnp.tanh(g[:, 2 * H:3 * H])
            o = jax.nn.sigmoid(g[:, 3 * H:])
            c = f * c_prev + i * gg
            hh = o * jnp.tanh(c)
            return (hh, c), hh
        h0 = jnp.zeros((B, H), jnp.float32)
        c0 = jnp.zeros((B, H), jnp.float32)
        _, ys = jax.lax.scan(cell, (h0, c0), jnp.swapaxes(x_seq, 0, 1))
        return jnp.swapaxes(ys, 0, 1)

    for dirs in params["lstm"]:
        fwd = run_dir(inp, dirs[0])
        if rnn_bidirectional:
            bwd = run_dir(inp[:, ::-1], dirs[1])[:, ::-1]
            inp = jnp.concatenate([fwd, bwd], axis=-1)
        else:
            inp = fwd
    w_f, b_f = params["final"]
    return inp @ w_f.T + b_f


# ---------------------------------- main ------------------------------------ #

if __name__ == "__main__":
    sequence_length = 8
    pose_dim = 12
    latent_dim = 8
    rnn_layer_count = 2
    rnn_layer_size = 32
    rnn_bidirectional = False
    dense_layer_sizes = [16, 32]
    batch = 2

    key = jax.random.PRNGKey(0)
    key, pkey, xkey = jax.random.split(key, 3)

    params = init_decoder_params(
        pkey, sequence_length, pose_dim, latent_dim, rnn_layer_count,
        rnn_layer_size, rnn_bidirectional, dense_layer_sizes)

    x = jax.random.normal(xkey, (batch, latent_dim), dtype=jnp.float32)

    fwd = jax.jit(functools.partial(
        decoder_forward,
        sequence_length=sequence_length,
        pose_dim=pose_dim,
        rnn_layer_size=rnn_layer_size,
        rnn_bidirectional=rnn_bidirectional,
    ))
    yhat = fwd(params, x)
    jax.block_until_ready(yhat)
    assert yhat.shape == (batch, sequence_length, pose_dim), yhat.shape

    yref = decoder_reference(
        params, x, sequence_length=sequence_length,
        rnn_layer_size=rnn_layer_size, rnn_bidirectional=rnn_bidirectional)
    err = float(np.max(np.abs(np.asarray(yhat) - np.asarray(yref))))
    assert np.allclose(np.asarray(yhat), np.asarray(yref),
                       atol=3e-4, rtol=3e-3), err

    print("KERNEL_OK")
</pallas_src>

<mosaic_0001>
module attributes {stable_mosaic.version = 11 : i64} {
  func.func @_decoder_kernel(%arg0: memref<8x8xf32, #tpu.memory_space<vmem>>, %arg1: memref<8x16xf32, #tpu.memory_space<vmem>>, %arg2: memref<1x16xf32, #tpu.memory_space<vmem>>, %arg3: memref<16x32xf32, #tpu.memory_space<vmem>>, %arg4: memref<1x32xf32, #tpu.memory_space<vmem>>, %arg5: memref<32x128xf32, #tpu.memory_space<vmem>>, %arg6: memref<32x128xf32, #tpu.memory_space<vmem>>, %arg7: memref<1x128xf32, #tpu.memory_space<vmem>>, %arg8: memref<32x128xf32, #tpu.memory_space<vmem>>, %arg9: memref<32x128xf32, #tpu.memory_space<vmem>>, %arg10: memref<1x128xf32, #tpu.memory_space<vmem>>, %arg11: memref<32x128xf32, #tpu.memory_space<vmem>>, %arg12: memref<1x128xf32, #tpu.memory_space<vmem>>, %arg13: memref<64x128xf32, #tpu.memory_space<vmem>>) attributes {dimension_semantics = [], scalar_prefetch = 0 : i64, scratch_operands = 0 : i64, tpu.core_type = #tpu.core_type<tc>} {
    %c0 = arith.constant 0 : index
    %c0_0 = arith.constant 0 : index
    %0 = vector.load %arg0[%c0, %c0_0] : memref<8x8xf32, #tpu.memory_space<vmem>>, vector<8x8xf32>
    %c0_1 = arith.constant 0 : index
    %c0_2 = arith.constant 0 : index
    %1 = vector.load %arg1[%c0_1, %c0_2] : memref<8x16xf32, #tpu.memory_space<vmem>>, vector<8x16xf32>
    %cst = arith.constant dense<0.000000e+00> : vector<8x16xf32>
    %2 = tpu.matmul %0, %1, %cst {dimension_numbers = #tpu.dot_dimension_numbers<[1], [0], [0], [1], [0, 0, 1, 1], [], []>} : vector<8x8xf32>, vector<8x16xf32>, vector<8x16xf32> -> vector<8x16xf32>
    %c0_3 = arith.constant 0 : index
    %c0_4 = arith.constant 0 : index
    %3 = vector.load %arg2[%c0_3, %c0_4] : memref<1x16xf32, #tpu.memory_space<vmem>>, vector<1x16xf32>
    %4 = vector.broadcast %3 : vector<1x16xf32> to vector<8x16xf32>
    %5 = arith.addf %2, %4 : vector<8x16xf32>
    %cst_5 = arith.constant 0.000000e+00 : f32
    %6 = vector.broadcast %cst_5 : f32 to vector<8x16xf32>
    %7 = arith.maximumf %5, %6 : vector<8x16xf32>
    %c0_6 = arith.constant 0 : index
    %c0_7 = arith.constant 0 : index
    %8 = vector.load %arg3[%c0_6, %c0_7] : memref<16x32xf32, #tpu.memory_space<vmem>>, vector<16x32xf32>
    %cst_8 = arith.constant dense<0.000000e+00> : vector<8x32xf32>
    %9 = tpu.matmul %7, %8, %cst_8 {dimension_numbers = #tpu.dot_dimension_numbers<[1], [0], [0], [1], [0, 0, 1, 1], [], []>} : vector<8x16xf32>, vector<16x32xf32>, vector<8x32xf32> -> vector<8x32xf32>
    %c0_9 = arith.constant 0 : index
    %c0_10 = arith.constant 0 : index
    %10 = vector.load %arg4[%c0_9, %c0_10] : memref<1x32xf32, #tpu.memory_space<vmem>>, vector<1x32xf32>
    %11 = vector.broadcast %10 : vector<1x32xf32> to vector<8x32xf32>
    %12 = arith.addf %9, %11 : vector<8x32xf32>
    %cst_11 = arith.constant 0.000000e+00 : f32
    %13 = vector.broadcast %cst_11 : f32 to vector<8x32xf32>
    %14 = arith.maximumf %12, %13 : vector<8x32xf32>
    %c0_12 = arith.constant 0 : index
    %c0_13 = arith.constant 0 : index
    %15 = vector.load %arg5[%c0_12, %c0_13] : memref<32x128xf32, #tpu.memory_space<vmem>>, vector<32x128xf32>
    %c0_14 = arith.constant 0 : index
    %c0_15 = arith.constant 0 : index
    %16 = vector.load %arg6[%c0_14, %c0_15] : memref<32x128xf32, #tpu.memory_space<vmem>>, vector<32x128xf32>
    %c0_16 = arith.constant 0 : index
    %c0_17 = arith.constant 0 : index
    %17 = vector.load %arg7[%c0_16, %c0_17] : memref<1x128xf32, #tpu.memory_space<vmem>>, vector<1x128xf32>
    %cst_18 = arith.constant dense<0.000000e+00> : vector<8x128xf32>
    %18 = tpu.matmul %14, %15, %cst_18 {dimension_numbers = #tpu.dot_dimension_numbers<[1], [0], [0], [1], [0, 0, 1, 1], [], []>} : vector<8x32xf32>, vector<32x128xf32>, vector<8x128xf32> -> vector<8x128xf32>
    %19 = vector.broadcast %17 : vector<1x128xf32> to vector<8x128xf32>
    %20 = arith.addf %18, %19 : vector<8x128xf32>
    %cst_19 = arith.constant 0.000000e+00 : f32
    %21 = vector.broadcast %cst_19 : f32 to vector<8x32xf32>
    %cst_20 = arith.constant 0.000000e+00 : f32
    %22 = vector.broadcast %cst_20 : f32 to vector<8x32xf32>
    %cst_21 = arith.constant dense<0.000000e+00> : vector<8x128xf32>
    %23 = tpu.matmul %21, %16, %cst_21 {dimension_numbers = #tpu.dot_dimension_numbers<[1], [0], [0], [1], [0, 0, 1, 1], [], []>} : vector<8x32xf32>, vector<32x128xf32>, vector<8x128xf32> -> vector<8x128xf32>
    %24 = arith.addf %20, %23 : vector<8x128xf32>
    %25 = arith.negf %24 : vector<8x128xf32>
    %26 = math.exp %25 : vector<8x128xf32>
    %cst_22 = arith.constant 1.000000e+00 : f32
    %27 = vector.broadcast %cst_22 : f32 to vector<8x128xf32>
    %28 = arith.addf %27, %26 : vector<8x128xf32>
    %29 = arith.divf %27, %28 : vector<8x128xf32>
    %30 = vector.extract_strided_slice %29 {offsets = [0, 0], sizes = [8, 32], strides = [1, 1]} : vector<8x128xf32> to vector<8x32xf32>
    %31 = vector.extract_strided_slice %29 {offsets = [0, 32], sizes = [8, 32], strides = [1, 1]} : vector<8x128xf32> to vector<8x32xf32>
    %32 = vector.extract_strided_slice %29 {offsets = [0, 96], sizes = [8, 32], strides = [1, 1]} : vector<8x128xf32> to vector<8x32xf32>
    %33 = vector.extract_strided_slice %24 {offsets = [0, 64], sizes = [8, 32], strides = [1, 1]} : vector<8x128xf32> to vector<8x32xf32>
    %34 = math.tanh %33 : vector<8x32xf32>
    %35 = arith.mulf %31, %22 : vector<8x32xf32>
    %36 = arith.mulf %30, %34 : vector<8x32xf32>
    %37 = arith.addf %35, %36 : vector<8x32xf32>
    %38 = math.tanh %37 : vector<8x32xf32>
    %39 = arith.mulf %32, %38 : vector<8x32xf32>
    %cst_23 = arith.constant dense<0.000000e+00> : vector<8x128xf32>
    %40 = tpu.matmul %39, %16, %cst_23 {dimension_numbers = #tpu.dot_dimension_numbers<[1], [0], [0], [1], [0, 0, 1, 1], [], []>} : vector<8x32xf32>, vector<32x128xf32>, vector<8x128xf32> -> vector<8x128xf32>
    %41 = arith.addf %20, %40 : vector<8x128xf32>
    %42 = arith.negf %41 : vector<8x128xf32>
    %43 = math.exp %42 : vector<8x128xf32>
    %cst_24 = arith.constant 1.000000e+00 : f32
    %44 = vector.broadcast %cst_24 : f32 to vector<8x128xf32>
    %45 = arith.addf %44, %43 : vector<8x128xf32>
    %46 = arith.divf %44, %45 : vector<8x128xf32>
    %47 = vector.extract_strided_slice %46 {offsets = [0, 0], sizes = [8, 32], strides = [1, 1]} : vector<8x128xf32> to vector<8x32xf32>
    %48 = vector.extract_strided_slice %46 {offsets = [0, 32], sizes = [8, 32], strides = [1, 1]} : vector<8x128xf32> to vector<8x32xf32>
    %49 = vector.extract_strided_slice %46 {offsets = [0, 96], sizes = [8, 32], strides = [1, 1]} : vector<8x128xf32> to vector<8x32xf32>
    %50 = vector.extract_strided_slice %41 {offsets = [0, 64], sizes = [8, 32], strides = [1, 1]} : vector<8x128xf32> to vector<8x32xf32>
    %51 = math.tanh %50 : vector<8x32xf32>
    %52 = arith.mulf %48, %37 : vector<8x32xf32>
    %53 = arith.mulf %47, %51 : vector<8x32xf32>
    %54 = arith.addf %52, %53 : vector<8x32xf32>
    %55 = math.tanh %54 : vector<8x32xf32>
    %56 = arith.mulf %49, %55 : vector<8x32xf32>
    %cst_25 = arith.constant dense<0.000000e+00> : vector<8x128xf32>
    %57 = tpu.matmul %56, %16, %cst_25 {dimension_numbers = #tpu.dot_dimension_numbers<[1], [0], [0], [1], [0, 0, 1, 1], [], []>} : vector<8x32xf32>, vector<32x128xf32>, vector<8x128xf32> -> vector<8x128xf32>
    %58 = arith.addf %20, %57 : vector<8x128xf32>
    %59 = arith.negf %58 : vector<8x128xf32>
    %60 = math.exp %59 : vector<8x128xf32>
    %cst_26 = arith.constant 1.000000e+00 : f32
    %61 = vector.broadcast %cst_26 : f32 to vector<8x128xf32>
    %62 = arith.addf %61, %60 : vector<8x128xf32>
    %63 = arith.divf %61, %62 : vector<8x128xf32>
    %64 = vector.extract_strided_slice %63 {offsets = [0, 0], sizes = [8, 32], strides = [1, 1]} : vector<8x128xf32> to vector<8x32xf32>
    %65 = vector.extract_strided_slice %63 {offsets = [0, 32], sizes = [8, 32], strides = [1, 1]} : vector<8x128xf32> to vector<8x32xf32>
    %66 = vector.extract_strided_slice %63 {offsets = [0, 96], sizes = [8, 32], strides = [1, 1]} : vector<8x128xf32> to vector<8x32xf32>
    %67 = vector.extract_strided_slice %58 {offsets = [0, 64], sizes = [8, 32], strides = [1, 1]} : vector<8x128xf32> to vector<8x32xf32>
    %68 = math.tanh %67 : vector<8x32xf32>
    %69 = arith.mulf %65, %54 : vector<8x32xf32>
    %70 = arith.mulf %64, %68 : vector<8x32xf32>
    %71 = arith.addf %69, %70 : vector<8x32xf32>
    %72 = math.tanh %71 : vector<8x32xf32>
    %73 = arith.mulf %66, %72 : vector<8x32xf32>
    %cst_27 = arith.constant dense<0.000000e+00> : vector<8x128xf32>
    %74 = tpu.matmul %73, %16, %cst_27 {dimension_numbers = #tpu.dot_dimension_numbers<[1], [0], [0], [1], [0, 0, 1, 1], [], []>} : vector<8x32xf32>, vector<32x128xf32>, vector<8x128xf32> -> vector<8x128xf32>
    %75 = arith.addf %20, %74 : vector<8x128xf32>
    %76 = arith.negf %75 : vector<8x128xf32>
    %77 = math.exp %76 : vector<8x128xf32>
    %cst_28 = arith.constant 1.000000e+00 : f32
    %78 = vector.broadcast %cst_28 : f32 to vector<8x128xf32>
    %79 = arith.addf %78, %77 : vector<8x128xf32>
    %80 = arith.divf %78, %79 : vector<8x128xf32>
    %81 = vector.extract_strided_slice %80 {offsets = [0, 0], sizes = [8, 32], strides = [1, 1]} : vector<8x128xf32> to vector<8x32xf32>
    %82 = vector.extract_strided_slice %80 {offsets = [0, 32], sizes = [8, 32], strides = [1, 1]} : vector<8x128xf32> to vector<8x32xf32>
    %83 = vector.extract_strided_slice %80 {offsets = [0, 96], sizes = [8, 32], strides = [1, 1]} : vector<8x128xf32> to vector<8x32xf32>
    %84 = vector.extract_strided_slice %75 {offsets = [0, 64], sizes = [8, 32], strides = [1, 1]} : vector<8x128xf32> to vector<8x32xf32>
    %85 = math.tanh %84 : vector<8x32xf32>
    %86 = arith.mulf %82, %71 : vector<8x32xf32>
    %87 = arith.mulf %81, %85 : vector<8x32xf32>
    %88 = arith.addf %86, %87 : vector<8x32xf32>
    %89 = math.tanh %88 : vector<8x32xf32>
    %90 = arith.mulf %83, %89 : vector<8x32xf32>
    %cst_29 = arith.constant dense<0.000000e+00> : vector<8x128xf32>
    %91 = tpu.matmul %90, %16, %cst_29 {dimension_numbers = #tpu.dot_dimension_numbers<[1], [0], [0], [1], [0, 0, 1, 1], [], []>} : vector<8x32xf32>, vector<32x128xf32>, vector<8x128xf32> -> vector<8x128xf32>
    %92 = arith.addf %20, %91 : vector<8x128xf32>
    %93 = arith.negf %92 : vector<8x128xf32>
    %94 = math.exp %93 : vector<8x128xf32>
    %cst_30 = arith.constant 1.000000e+00 : f32
    %95 = vector.broadcast %cst_30 : f32 to vector<8x128xf32>
    %96 = arith.addf %95, %94 : vector<8x128xf32>
    %97 = arith.divf %95, %96 : vector<8x128xf32>
    %98 = vector.extract_strided_slice %97 {offsets = [0, 0], sizes = [8, 32], strides = [1, 1]} : vector<8x128xf32> to vector<8x32xf32>
    %99 = vector.extract_strided_slice %97 {offsets = [0, 32], sizes = [8, 32], strides = [1, 1]} : vector<8x128xf32> to vector<8x32xf32>
    %100 = vector.extract_strided_slice %97 {offsets = [0, 96], sizes = [8, 32], strides = [1, 1]} : vector<8x128xf32> to vector<8x32xf32>
    %101 = vector.extract_strided_slice %92 {offsets = [0, 64], sizes = [8, 32], strides = [1, 1]} : vector<8x128xf32> to vector<8x32xf32>
    %102 = math.tanh %101 : vector<8x32xf32>
    %103 = arith.mulf %99, %88 : vector<8x32xf32>
    %104 = arith.mulf %98, %102 : vector<8x32xf32>
    %105 = arith.addf %103, %104 : vector<8x32xf32>
    %106 = math.tanh %105 : vector<8x32xf32>
    %107 = arith.mulf %100, %106 : vector<8x32xf32>
    %cst_31 = arith.constant dense<0.000000e+00> : vector<8x128xf32>
    %108 = tpu.matmul %107, %16, %cst_31 {dimension_numbers = #tpu.dot_dimension_numbers<[1], [0], [0], [1], [0, 0, 1, 1], [], []>} : vector<8x32xf32>, vector<32x128xf32>, vector<8x128xf32> -> vector<8x128xf32>
    %109 = arith.addf %20, %108 : vector<8x128xf32>
    %110 = arith.negf %109 : vector<8x128xf32>
    %111 = math.exp %110 : vector<8x128xf32>
    %cst_32 = arith.constant 1.000000e+00 : f32
    %112 = vector.broadcast %cst_32 : f32 to vector<8x128xf32>
    %113 = arith.addf %112, %111 : vector<8x128xf32>
    %114 = arith.divf %112, %113 : vector<8x128xf32>
    %115 = vector.extract_strided_slice %114 {offsets = [0, 0], sizes = [8, 32], strides = [1, 1]} : vector<8x128xf32> to vector<8x32xf32>
    %116 = vector.extract_strided_slice %114 {offsets = [0, 32], sizes = [8, 32], strides = [1, 1]} : vector<8x128xf32> to vector<8x32xf32>
    %117 = vector.extract_strided_slice %114 {offsets = [0, 96], sizes = [8, 32], strides = [1, 1]} : vector<8x128xf32> to vector<8x32xf32>
    %118 = vector.extract_strided_slice %109 {offsets = [0, 64], sizes = [8, 32], strides = [1, 1]} : vector<8x128xf32> to vector<8x32xf32>
    %119 = math.tanh %118 : vector<8x32xf32>
    %120 = arith.mulf %116, %105 : vector<8x32xf32>
    %121 = arith.mulf %115, %119 : vector<8x32xf32>
    %122 = arith.addf %120, %121 : vector<8x32xf32>
    %123 = math.tanh %122 : vector<8x32xf32>
    %124 = arith.mulf %117, %123 : vector<8x32xf32>
    %cst_33 = arith.constant dense<0.000000e+00> : vector<8x128xf32>
    %125 = tpu.matmul %124, %16, %cst_33 {dimension_numbers = #tpu.dot_dimension_numbers<[1], [0], [0], [1], [0, 0, 1, 1], [], []>} : vector<8x32xf32>, vector<32x128xf32>, vector<8x128xf32> -> vector<8x128xf32>
    %126 = arith.addf %20, %125 : vector<8x128xf32>
    %127 = arith.negf %126 : vector<8x128xf32>
    %128 = math.exp %127 : vector<8x128xf32>
    %cst_34 = arith.constant 1.000000e+00 : f32
    %129 = vector.broadcast %cst_34 : f32 to vector<8x128xf32>
    %130 = arith.addf %129, %128 : vector<8x128xf32>
    %131 = arith.divf %129, %130 : vector<8x128xf32>
    %132 = vector.extract_strided_slice %131 {offsets = [0, 0], sizes = [8, 32], strides = [1, 1]} : vector<8x128xf32> to vector<8x32xf32>
    %133 = vector.extract_strided_slice %131 {offsets = [0, 32], sizes = [8, 32], strides = [1, 1]} : vector<8x128xf32> to vector<8x32xf32>
    %134 = vector.extract_strided_slice %131 {offsets = [0, 96], sizes = [8, 32], strides = [1, 1]} : vector<8x128xf32> to vector<8x32xf32>
    %135 = vector.extract_strided_slice %126 {offsets = [0, 64], sizes = [8, 32], strides = [1, 1]} : vector<8x128xf32> to vector<8x32xf32>
    %136 = math.tanh %135 : vector<8x32xf32>
    %137 = arith.mulf %133, %122 : vector<8x32xf32>
    %138 = arith.mulf %132, %136 : vector<8x32xf32>
    %139 = arith.addf %137, %138 : vector<8x32xf32>
    %140 = math.tanh %139 : vector<8x32xf32>
    %141 = arith.mulf %134, %140 : vector<8x32xf32>
    %cst_35 = arith.constant dense<0.000000e+00> : vector<8x128xf32>
    %142 = tpu.matmul %141, %16, %cst_35 {dimension_numbers = #tpu.dot_dimension_numbers<[1], [0], [0], [1], [0, 0, 1, 1], [], []>} : vector<8x32xf32>, vector<32x128xf32>, vector<8x128xf32> -> vector<8x128xf32>
    %143 = arith.addf %20, %142 : vector<8x128xf32>
    %144 = arith.negf %143 : vector<8x128xf32>
    %145 = math.exp %144 : vector<8x128xf32>
    %cst_36 = arith.constant 1.000000e+00 : f32
    %146 = vector.broadcast %cst_36 : f32 to vector<8x128xf32>
    %147 = arith.addf %146, %145 : vector<8x128xf32>
    %148 = arith.divf %146, %147 : vector<8x128xf32>
    %149 = vector.extract_strided_slice %148 {offsets = [0, 0], sizes = [8, 32], strides = [1, 1]} : vector<8x128xf32> to vector<8x32xf32>
    %150 = vector.extract_strided_slice %148 {offsets = [0, 32], sizes = [8, 32], strides = [1, 1]} : vector<8x128xf32> to vector<8x32xf32>
    %151 = vector.extract_strided_slice %148 {offsets = [0, 96], sizes = [8, 32], strides = [1, 1]} : vector<8x128xf32> to vector<8x32xf32>
    %152 = vector.extract_strided_slice %143 {offsets = [0, 64], sizes = [8, 32], strides = [1, 1]} : vector<8x128xf32> to vector<8x32xf32>
    %153 = math.tanh %152 : vector<8x32xf32>
    %154 = arith.mulf %150, %139 : vector<8x32xf32>
    %155 = arith.mulf %149, %153 : vector<8x32xf32>
    %156 = arith.addf %154, %155 : vector<8x32xf32>
    %157 = math.tanh %156 : vector<8x32xf32>
    %158 = arith.mulf %151, %157 : vector<8x32xf32>
    %c0_37 = arith.constant 0 : index
    %c0_38 = arith.constant 0 : index
    %159 = vector.load %arg8[%c0_37, %c0_38] : memref<32x128xf32, #tpu.memory_space<vmem>>, vector<32x128xf32>
    %c0_39 = arith.constant 0 : index
    %c0_40 = arith.constant 0 : index
    %160 = vector.load %arg9[%c0_39, %c0_40] : memref<32x128xf32, #tpu.memory_space<vmem>>, vector<32x128xf32>
    %c0_41 = arith.constant 0 : index
    %c0_42 = arith.constant 0 : index
    %161 = vector.load %arg10[%c0_41, %c0_42] : memref<1x128xf32, #tpu.memory_space<vmem>>, vector<1x128xf32>
    %162 = tpu.concatenate %39, %56, %73, %90, %107, %124, %141, %158 in 0 : vector<8x32xf32>, vector<8x32xf32>, vector<8x32xf32>, vector<8x32xf32>, vector<8x32xf32>, vector<8x32xf32>, vector<8x32xf32>, vector<8x32xf32> -> vector<64x32xf32>
    %cst_43 = arith.constant dense<0.000000e+00> : vector<64x128xf32>
    %163 = tpu.matmul %162, %159, %cst_43 {dimension_numbers = #tpu.dot_dimension_numbers<[1], [0], [0], [1], [0, 0, 1, 1], [], []>} : vector<64x32xf32>, vector<32x128xf32>, vector<64x128xf32> -> vector<64x128xf32>
    %164 = vector.broadcast %161 : vector<1x128xf32> to vector<64x128xf32>
    %165 = arith.addf %163, %164 : vector<64x128xf32>
    %cst_44 = arith.constant 0.000000e+00 : f32
    %166 = vector.broadcast %cst_44 : f32 to vector<8x32xf32>
    %cst_45 = arith.constant 0.000000e+00 : f32
    %167 = vector.broadcast %cst_45 : f32 to vector<8x32xf32>
    %168 = vector.extract_strided_slice %165 {offsets = [0, 0], sizes = [8, 128], strides = [1, 1]} : vector<64x128xf32> to vector<8x128xf32>
    %cst_46 = arith.constant dense<0.000000e+00> : vector<8x128xf32>
    %169 = tpu.matmul %166, %160, %cst_46 {dimension_numbers = #tpu.dot_dimension_numbers<[1], [0], [0], [1], [0, 0, 1, 1], [], []>} : vector<8x32xf32>, vector<32x128xf32>, vector<8x128xf32> -> vector<8x128xf32>
    %170 = arith.addf %168, %169 : vector<8x128xf32>
    %171 = arith.negf %170 : vector<8x128xf32>
    %172 = math.exp %171 : vector<8x128xf32>
    %cst_47 = arith.constant 1.000000e+00 : f32
    %173 = vector.broadcast %cst_47 : f32 to vector<8x128xf32>
    %174 = arith.addf %173, %172 : vector<8x128xf32>
    %175 = arith.divf %173, %174 : vector<8x128xf32>
    %176 = vector.extract_strided_slice %175 {offsets = [0, 0], sizes = [8, 32], strides = [1, 1]} : vector<8x128xf32> to vector<8x32xf32>
    %177 = vector.extract_strided_slice %175 {offsets = [0, 32], sizes = [8, 32], strides = [1, 1]} : vector<8x128xf32> to vector<8x32xf32>
    %178 = vector.extract_strided_slice %175 {offsets = [0, 96], sizes = [8, 32], strides = [1, 1]} : vector<8x128xf32> to vector<8x32xf32>
    %179 = vector.extract_strided_slice %170 {offsets = [0, 64], sizes = [8, 32], strides = [1, 1]} : vector<8x128xf32> to vector<8x32xf32>
    %180 = math.tanh %179 : vector<8x32xf32>
    %181 = arith.mulf %177, %167 : vector<8x32xf32>
    %182 = arith.mulf %176, %180 : vector<8x32xf32>
    %183 = arith.addf %181, %182 : vector<8x32xf32>
    %184 = math.tanh %183 : vector<8x32xf32>
    %185 = arith.mulf %178, %184 : vector<8x32xf32>
    %186 = vector.extract_strided_slice %165 {offsets = [8, 0], sizes = [8, 128], strides = [1, 1]} : vector<64x128xf32> to vector<8x128xf32>
    %cst_48 = arith.constant dense<0.000000e+00> : vector<8x128xf32>
    %187 = tpu.matmul %185, %160, %cst_48 {dimension_numbers = #tpu.dot_dimension_numbers<[1], [0], [0], [1], [0, 0, 1, 1], [], []>} : vector<8x32xf32>, vector<32x128xf32>, vector<8x128xf32> -> vector<8x128xf32>
    %188 = arith.addf %186, %187 : vector<8x128xf32>
    %189 = arith.negf %188 : vector<8x128xf32>
    %190 = math.exp %189 : vector<8x128xf32>
    %cst_49 = arith.constant 1.000000e+00 : f32
    %191 = vector.broadcast %cst_49 : f32 to vector<8x128xf32>
    %192 = arith.addf %191, %190 : vector<8x128xf32>
    %193 = arith.divf %191, %192 : vector<8x128xf32>
    %194 = vector.extract_strided_slice %193 {offsets = [0, 0], sizes = [8, 32], strides = [1, 1]} : vector<8x128xf32> to vector<8x32xf32>
    %195 = vector.extract_strided_slice %193 {offsets = [0, 32], sizes = [8, 32], strides = [1, 1]} : vector<8x128xf32> to vector<8x32xf32>
    %196 = vector.extract_strided_slice %193 {offsets = [0, 96], sizes = [8, 32], strides = [1, 1]} : vector<8x128xf32> to vector<8x32xf32>
    %197 = vector.extract_strided_slice %188 {offsets = [0, 64], sizes = [8, 32], strides = [1, 1]} : vector<8x128xf32> to vector<8x32xf32>
    %198 = math.tanh %197 : vector<8x32xf32>
    %199 = arith.mulf %195, %183 : vector<8x32xf32>
    %200 = arith.mulf %194, %198 : vector<8x32xf32>
    %201 = arith.addf %199, %200 : vector<8x32xf32>
    %202 = math.tanh %201 : vector<8x32xf32>
    %203 = arith.mulf %196, %202 : vector<8x32xf32>
    %204 = vector.extract_strided_slice %165 {offsets = [16, 0], sizes = [8, 128], strides = [1, 1]} : vector<64x128xf32> to vector<8x128xf32>
    %cst_50 = arith.constant dense<0.000000e+00> : vector<8x128xf32>
    %205 = tpu.matmul %203, %160, %cst_50 {dimension_numbers = #tpu.dot_dimension_numbers<[1], [0], [0], [1], [0, 0, 1, 1], [], []>} : vector<8x32xf32>, vector<32x128xf32>, vector<8x128xf32> -> vector<8x128xf32>
    %206 = arith.addf %204, %205 : vector<8x128xf32>
    %207 = arith.negf %206 : vector<8x128xf32>
    %208 = math.exp %207 : vector<8x128xf32>
    %cst_51 = arith.constant 1.000000e+00 : f32
    %209 = vector.broadcast %cst_51 : f32 to vector<8x128xf32>
    %210 = arith.addf %209, %208 : vector<8x128xf32>
    %211 = arith.divf %209, %210 : vector<8x128xf32>
    %212 = vector.extract_strided_slice %211 {offsets = [0, 0], sizes = [8, 32], strides = [1, 1]} : vector<8x128xf32> to vector<8x32xf32>
    %213 = vector.extract_strided_slice %211 {offsets = [0, 32], sizes = [8, 32], strides = [1, 1]} : vector<8x128xf32> to vector<8x32xf32>
    %214 = vector.extract_strided_slice %211 {offsets = [0, 96], sizes = [8, 32], strides = [1, 1]} : vector<8x128xf32> to vector<8x32xf32>
    %215 = vector.extract_strided_slice %206 {offsets = [0, 64], sizes = [8, 32], strides = [1, 1]} : vector<8x128xf32> to vector<8x32xf32>
    %216 = math.tanh %215 : vector<8x32xf32>
    %217 = arith.mulf %213, %201 : vector<8x32xf32>
    %218 = arith.mulf %212, %216 : vector<8x32xf32>
    %219 = arith.addf %217, %218 : vector<8x32xf32>
    %220 = math.tanh %219 : vector<8x32xf32>
    %221 = arith.mulf %214, %220 : vector<8x32xf32>
    %222 = vector.extract_strided_slice %165 {offsets = [24, 0], sizes = [8, 128], strides = [1, 1]} : vector<64x128xf32> to vector<8x128xf32>
    %cst_52 = arith.constant dense<0.000000e+00> : vector<8x128xf32>
    %223 = tpu.matmul %221, %160, %cst_52 {dimension_numbers = #tpu.dot_dimension_numbers<[1], [0], [0], [1], [0, 0, 1, 1], [], []>} : vector<8x32xf32>, vector<32x128xf32>, vector<8x128xf32> -> vector<8x128xf32>
    %224 = arith.addf %222, %223 : vector<8x128xf32>
    %225 = arith.negf %224 : vector<8x128xf32>
    %226 = math.exp %225 : vector<8x128xf32>
    %cst_53 = arith.constant 1.000000e+00 : f32
    %227 = vector.broadcast %cst_53 : f32 to vector<8x128xf32>
    %228 = arith.addf %227, %226 : vector<8x128xf32>
    %229 = arith.divf %227, %228 : vector<8x128xf32>
    %230 = vector.extract_strided_slice %229 {offsets = [0, 0], sizes = [8, 32], strides = [1, 1]} : vector<8x128xf32> to vector<8x32xf32>
    %231 = vector.extract_strided_slice %229 {offsets = [0, 32], sizes = [8, 32], strides = [1, 1]} : vector<8x128xf32> to vector<8x32xf32>
    %232 = vector.extract_strided_slice %229 {offsets = [0, 96], sizes = [8, 32], strides = [1, 1]} : vector<8x128xf32> to vector<8x32xf32>
    %233 = vector.extract_strided_slice %224 {offsets = [0, 64], sizes = [8, 32], strides = [1, 1]} : vector<8x128xf32> to vector<8x32xf32>
    %234 = math.tanh %233 : vector<8x32xf32>
    %235 = arith.mulf %231, %219 : vector<8x32xf32>
    %236 = arith.mulf %230, %234 : vector<8x32xf32>
    %237 = arith.addf %235, %236 : vector<8x32xf32>
    %238 = math.tanh %237 : vector<8x32xf32>
    %239 = arith.mulf %232, %238 : vector<8x32xf32>
    %240 = vector.extract_strided_slice %165 {offsets = [32, 0], sizes = [8, 128], strides = [1, 1]} : vector<64x128xf32> to vector<8x128xf32>
    %cst_54 = arith.constant dense<0.000000e+00> : vector<8x128xf32>
    %241 = tpu.matmul %239, %160, %cst_54 {dimension_numbers = #tpu.dot_dimension_numbers<[1], [0], [0], [1], [0, 0, 1, 1], [], []>} : vector<8x32xf32>, vector<32x128xf32>, vector<8x128xf32> -> vector<8x128xf32>
    %242 = arith.addf %240, %241 : vector<8x128xf32>
    %243 = arith.negf %242 : vector<8x128xf32>
    %244 = math.exp %243 : vector<8x128xf32>
    %cst_55 = arith.constant 1.000000e+00 : f32
    %245 = vector.broadcast %cst_55 : f32 to vector<8x128xf32>
    %246 = arith.addf %245, %244 : vector<8x128xf32>
    %247 = arith.divf %245, %246 : vector<8x128xf32>
    %248 = vector.extract_strided_slice %247 {offsets = [0, 0], sizes = [8, 32], strides = [1, 1]} : vector<8x128xf32> to vector<8x32xf32>
    %249 = vector.extract_strided_slice %247 {offsets = [0, 32], sizes = [8, 32], strides = [1, 1]} : vector<8x128xf32> to vector<8x32xf32>
    %250 = vector.extract_strided_slice %247 {offsets = [0, 96], sizes = [8, 32], strides = [1, 1]} : vector<8x128xf32> to vector<8x32xf32>
    %251 = vector.extract_strided_slice %242 {offsets = [0, 64], sizes = [8, 32], strides = [1, 1]} : vector<8x128xf32> to vector<8x32xf32>
    %252 = math.tanh %251 : vector<8x32xf32>
    %253 = arith.mulf %249, %237 : vector<8x32xf32>
    %254 = arith.mulf %248, %252 : vector<8x32xf32>
    %255 = arith.addf %253, %254 : vector<8x32xf32>
    %256 = math.tanh %255 : vector<8x32xf32>
    %257 = arith.mulf %250, %256 : vector<8x32xf32>
    %258 = vector.extract_strided_slice %165 {offsets = [40, 0], sizes = [8, 128], strides = [1, 1]} : vector<64x128xf32> to vector<8x128xf32>
    %cst_56 = arith.constant dense<0.000000e+00> : vector<8x128xf32>
    %259 = tpu.matmul %257, %160, %cst_56 {dimension_numbers = #tpu.dot_dimension_numbers<[1], [0], [0], [1], [0, 0, 1, 1], [], []>} : vector<8x32xf32>, vector<32x128xf32>, vector<8x128xf32> -> vector<8x128xf32>
    %260 = arith.addf %258, %259 : vector<8x128xf32>
    %261 = arith.negf %260 : vector<8x128xf32>
    %262 = math.exp %261 : vector<8x128xf32>
    %cst_57 = arith.constant 1.000000e+00 : f32
    %263 = vector.broadcast %cst_57 : f32 to vector<8x128xf32>
    %264 = arith.addf %263, %262 : vector<8x128xf32>
    %265 = arith.divf %263, %264 : vector<8x128xf32>
    %266 = vector.extract_strided_slice %265 {offsets = [0, 0], sizes = [8, 32], strides = [1, 1]} : vector<8x128xf32> to vector<8x32xf32>
    %267 = vector.extract_strided_slice %265 {offsets = [0, 32], sizes = [8, 32], strides = [1, 1]} : vector<8x128xf32> to vector<8x32xf32>
    %268 = vector.extract_strided_slice %265 {offsets = [0, 96], sizes = [8, 32], strides = [1, 1]} : vector<8x128xf32> to vector<8x32xf32>
    %269 = vector.extract_strided_slice %260 {offsets = [0, 64], sizes = [8, 32], strides = [1, 1]} : vector<8x128xf32> to vector<8x32xf32>
    %270 = math.tanh %269 : vector<8x32xf32>
    %271 = arith.mulf %267, %255 : vector<8x32xf32>
    %272 = arith.mulf %266, %270 : vector<8x32xf32>
    %273 = arith.addf %271, %272 : vector<8x32xf32>
    %274 = math.tanh %273 : vector<8x32xf32>
    %275 = arith.mulf %268, %274 : vector<8x32xf32>
    %276 = vector.extract_strided_slice %165 {offsets = [48, 0], sizes = [8, 128], strides = [1, 1]} : vector<64x128xf32> to vector<8x128xf32>
    %cst_58 = arith.constant dense<0.000000e+00> : vector<8x128xf32>
    %277 = tpu.matmul %275, %160, %cst_58 {dimension_numbers = #tpu.dot_dimension_numbers<[1], [0], [0], [1], [0, 0, 1, 1], [], []>} : vector<8x32xf32>, vector<32x128xf32>, vector<8x128xf32> -> vector<8x128xf32>
    %278 = arith.addf %276, %277 : vector<8x128xf32>
    %279 = arith.negf %278 : vector<8x128xf32>
    %280 = math.exp %279 : vector<8x128xf32>
    %cst_59 = arith.constant 1.000000e+00 : f32
    %281 = vector.broadcast %cst_59 : f32 to vector<8x128xf32>
    %282 = arith.addf %281, %280 : vector<8x128xf32>
    %283 = arith.divf %281, %282 : vector<8x128xf32>
    %284 = vector.extract_strided_slice %283 {offsets = [0, 0], sizes = [8, 32], strides = [1, 1]} : vector<8x128xf32> to vector<8x32xf32>
    %285 = vector.extract_strided_slice %283 {offsets = [0, 32], sizes = [8, 32], strides = [1, 1]} : vector<8x128xf32> to vector<8x32xf32>
    %286 = vector.extract_strided_slice %283 {offsets = [0, 96], sizes = [8, 32], strides = [1, 1]} : vector<8x128xf32> to vector<8x32xf32>
    %287 = vector.extract_strided_slice %278 {offsets = [0, 64], sizes = [8, 32], strides = [1, 1]} : vector<8x128xf32> to vector<8x32xf32>
    %288 = math.tanh %287 : vector<8x32xf32>
    %289 = arith.mulf %285, %273 : vector<8x32xf32>
    %290 = arith.mulf %284, %288 : vector<8x32xf32>
    %291 = arith.addf %289, %290 : vector<8x32xf32>
    %292 = math.tanh %291 : vector<8x32xf32>
    %293 = arith.mulf %286, %292 : vector<8x32xf32>
    %294 = vector.extract_strided_slice %165 {offsets = [56, 0], sizes = [8, 128], strides = [1, 1]} : vector<64x128xf32> to vector<8x128xf32>
    %cst_60 = arith.constant dense<0.000000e+00> : vector<8x128xf32>
    %295 = tpu.matmul %293, %160, %cst_60 {dimension_numbers = #tpu.dot_dimension_numbers<[1], [0], [0], [1], [0, 0, 1, 1], [], []>} : vector<8x32xf32>, vector<32x128xf32>, vector<8x128xf32> -> vector<8x128xf32>
    %296 = arith.addf %294, %295 : vector<8x128xf32>
    %297 = arith.negf %296 : vector<8x128xf32>
    %298 = math.exp %297 : vector<8x128xf32>
    %cst_61 = arith.constant 1.000000e+00 : f32
    %299 = vector.broadcast %cst_61 : f32 to vector<8x128xf32>
    %300 = arith.addf %299, %298 : vector<8x128xf32>
    %301 = arith.divf %299, %300 : vector<8x128xf32>
    %302 = vector.extract_strided_slice %301 {offsets = [0, 0], sizes = [8, 32], strides = [1, 1]} : vector<8x128xf32> to vector<8x32xf32>
    %303 = vector.extract_strided_slice %301 {offsets = [0, 32], sizes = [8, 32], strides = [1, 1]} : vector<8x128xf32> to vector<8x32xf32>
    %304 = vector.extract_strided_slice %301 {offsets = [0, 96], sizes = [8, 32], strides = [1, 1]} : vector<8x128xf32> to vector<8x32xf32>
    %305 = vector.extract_strided_slice %296 {offsets = [0, 64], sizes = [8, 32], strides = [1, 1]} : vector<8x128xf32> to vector<8x32xf32>
    %306 = math.tanh %305 : vector<8x32xf32>
    %307 = arith.mulf %303, %291 : vector<8x32xf32>
    %308 = arith.mulf %302, %306 : vector<8x32xf32>
    %309 = arith.addf %307, %308 : vector<8x32xf32>
    %310 = math.tanh %309 : vector<8x32xf32>
    %311 = arith.mulf %304, %310 : vector<8x32xf32>
    %c0_62 = arith.constant 0 : index
    %c0_63 = arith.constant 0 : index
    %312 = vector.load %arg11[%c0_62, %c0_63] : memref<32x128xf32, #tpu.memory_space<vmem>>, vector<32x128xf32>
    %c0_64 = arith.constant 0 : index
    %c0_65 = arith.constant 0 : index
    %313 = vector.load %arg12[%c0_64, %c0_65] : memref<1x128xf32, #tpu.memory_space<vmem>>, vector<1x128xf32>
    %314 = tpu.concatenate %185, %203, %221, %239, %257, %275, %293, %311 in 0 : vector<8x32xf32>, vector<8x32xf32>, vector<8x32xf32>, vector<8x32xf32>, vector<8x32xf32>, vector<8x32xf32>, vector<8x32xf32>, vector<8x32xf32> -> vector<64x32xf32>
    %cst_66 = arith.constant dense<0.000000e+00> : vector<64x128xf32>
    %315 = tpu.matmul %314, %312, %cst_66 {dimension_numbers = #tpu.dot_dimension_numbers<[1], [0], [0], [1], [0, 0, 1, 1], [], []>} : vector<64x32xf32>, vector<32x128xf32>, vector<64x128xf32> -> vector<64x128xf32>
    %316 = vector.broadcast %313 : vector<1x128xf32> to vector<64x128xf32>
    %317 = arith.addf %315, %316 : vector<64x128xf32>
    %c0_67 = arith.constant 0 : index
    %c0_68 = arith.constant 0 : index
    %318 = vector.load %arg13[%c0_67, %c0_68] : memref<64x128xf32, #tpu.memory_space<vmem>>, vector<64x128xf32>
    tpu.vector_store %arg13[%c0_67, %c0_68], %317 {strides = array<i32>} : memref<64x128xf32, #tpu.memory_space<vmem>>, vector<64x128xf32>,
    return
  }
}

</mosaic_0001>

<llo_original>
// kernel: decoder_forward.1
$region0: #{decoder_forward.1}
  #allocation0 [shape = 'u32[]', space=smem, size = 0x4, offset = 0x4, fixed_abs, tag = 'smem constant byte address 0x4 - core index']
  #allocation1 [shape = 'u32[72,128]{1,0:T(1,128)}', space=vmem, size = 0x9000, scoped, tag = 'internal scratch']
  %s0 = inlined_call_operand.vmem [shape: f32[8,8], index: 0, kind: input, shape index: {}]
  %s1 = inlined_call_operand.vmem [shape: f32[8,16], index: 1, kind: input, shape index: {}]
  %s2 = inlined_call_operand.vmem [shape: f32[1,16], index: 2, kind: input, shape index: {}]
  %s3 = inlined_call_operand.vmem [shape: f32[16,32], index: 3, kind: input, shape index: {}]
  %s4 = inlined_call_operand.vmem [shape: f32[1,32], index: 4, kind: input, shape index: {}]
  %s5 = inlined_call_operand.vmem [shape: f32[32,128], index: 5, kind: input, shape index: {}]
  %s6 = inlined_call_operand.vmem [shape: f32[32,128], index: 6, kind: input, shape index: {}]
  %s7 = inlined_call_operand.vmem [shape: f32[1,128], index: 7, kind: input, shape index: {}]
  %s8 = inlined_call_operand.vmem [shape: f32[32,128], index: 8, kind: input, shape index: {}]
  %s9 = inlined_call_operand.vmem [shape: f32[32,128], index: 9, kind: input, shape index: {}]
  %s10 = inlined_call_operand.vmem [shape: f32[1,128], index: 10, kind: input, shape index: {}]
  %s11 = inlined_call_operand.vmem [shape: f32[32,128], index: 11, kind: input, shape index: {}]
  %s12 = inlined_call_operand.vmem [shape: f32[1,128], index: 12, kind: input, shape index: {}]
  %s13 = inlined_call_operand.vmem [shape: f32[64,128], index: 13, kind: output, shape index: {}]
  %s14 = sld [smem:[#allocation0]]
  $region62: #{decoder_forward.1} parent=0
    _
  %s16 = ssub.s32 1, %s14
  %s17 = scalar_select 0, %s16, %s14
  // Predicated region
  $region2: #{decoder_forward.1} parent=0 // pred_check
    _
  $region3: #{decoder_forward.1} parent=0 // pred_check_branch
    %19 = sbr.rel (0) target = $region5
  $region4: #{decoder_forward.1} parent=0 // pred_region
    _
  $region5: #{decoder_forward.1} parent=0 // pred_fallthru
    _
  // Predicated region
  $region6: #{decoder_forward.1} parent=0 // pred_check
    _
  $region7: #{decoder_forward.1} parent=0 // pred_check_branch
    %21 = sbr.rel (0) target = $region9
  $region8: #{decoder_forward.1} parent=0 // pred_region
    _
  $region9: #{decoder_forward.1} parent=0 // pred_fallthru
    _
  // Predicated region
  $region10: #{decoder_forward.1} parent=0 // pred_check
    _
  $region11: #{decoder_forward.1} parent=0 // pred_check_branch
    %23 = sbr.rel (0) target = $region13
  $region12: #{decoder_forward.1} parent=0 // pred_region
    _
  $region13: #{decoder_forward.1} parent=0 // pred_fallthru
    _
  // Predicated region
  $region14: #{decoder_forward.1} parent=0 // pred_check
    _
  $region15: #{decoder_forward.1} parent=0 // pred_check_branch
    %25 = sbr.rel (0) target = $region17
  $region16: #{decoder_forward.1} parent=0 // pred_region
    _
  $region17: #{decoder_forward.1} parent=0 // pred_fallthru
    _
  // Predicated region
  $region18: #{decoder_forward.1} parent=0 // pred_check
    _
  $region19: #{decoder_forward.1} parent=0 // pred_check_branch
    %27 = sbr.rel (0) target = $region21
  $region20: #{decoder_forward.1} parent=0 // pred_region
    _
  $region21: #{decoder_forward.1} parent=0 // pred_fallthru
    _
  // Predicated region
  $region22: #{decoder_forward.1} parent=0 // pred_check
    _
  $region23: #{decoder_forward.1} parent=0 // pred_check_branch
    %29 = sbr.rel (0) target = $region25
  $region24: #{decoder_forward.1} parent=0 // pred_region
    _
  $region25: #{decoder_forward.1} parent=0 // pred_fallthru
    _
  // Predicated region
  $region26: #{decoder_forward.1} parent=0 // pred_check
    _
  $region27: #{decoder_forward.1} parent=0 // pred_check_branch
    %31 = sbr.rel (0) target = $region29
  $region28: #{decoder_forward.1} parent=0 // pred_region
    _
  $region29: #{decoder_forward.1} parent=0 // pred_fallthru
    _
  // Predicated region
  $region30: #{decoder_forward.1} parent=0 // pred_check
    _
  $region31: #{decoder_forward.1} parent=0 // pred_check_branch
    %33 = sbr.rel (0) target = $region33
  $region32: #{decoder_forward.1} parent=0 // pred_region
    _
  $region33: #{decoder_forward.1} parent=0 // pred_fallthru
    _
  // Predicated region
  $region34: #{decoder_forward.1} parent=0 // pred_check
    _
  $region35: #{decoder_forward.1} parent=0 // pred_check_branch
    %35 = sbr.rel (0) target = $region37
  $region36: #{decoder_forward.1} parent=0 // pred_region
    _
  $region37: #{decoder_forward.1} parent=0 // pred_fallthru
    _
  // Predicated region
  $region38: #{decoder_forward.1} parent=0 // pred_check
    _
  $region39: #{decoder_forward.1} parent=0 // pred_check_branch
    %37 = sbr.rel (0) target = $region41
  $region40: #{decoder_forward.1} parent=0 // pred_region
    _
  $region41: #{decoder_forward.1} parent=0 // pred_fallthru
    _
  // Predicated region
  $region42: #{decoder_forward.1} parent=0 // pred_check
    _
  $region43: #{decoder_forward.1} parent=0 // pred_check_branch
    %39 = sbr.rel (0) target = $region45
  $region44: #{decoder_forward.1} parent=0 // pred_region
    _
  $region45: #{decoder_forward.1} parent=0 // pred_fallthru
    _
  // Predicated region
  $region46: #{decoder_forward.1} parent=0 // pred_check
    _
  $region47: #{decoder_forward.1} parent=0 // pred_check_branch
    %41 = sbr.rel (0) target = $region49
  $region48: #{decoder_forward.1} parent=0 // pred_region
    _
  $region49: #{decoder_forward.1} parent=0 // pred_fallthru
    _
  // Predicated region
  $region50: #{decoder_forward.1} parent=0 // pred_check
    _
  $region51: #{decoder_forward.1} parent=0 // pred_check_branch
    %43 = sbr.rel (0) target = $region53
  $region52: #{decoder_forward.1} parent=0 // pred_region
    _
  $region53: #{decoder_forward.1} parent=0 // pred_fallthru
    _
  %v44 = vld [vmem:[%s0] sm:$0xff]
  %v45 = vld [vmem:[%s1] sm:$0xff]
  %v46 = vld [vmem:[%s2] sm:$0x1]
  %v48 = vperm.slane %v46, 0
  %vm50 = vcmask 64512
  %v52 = vsel %vm50, %v44, 0
  %54 = vmatpush.msra.mxu0 0.0
  %55 = vmatpush.msra.mxu0 0.0
  %56 = vmatpush.msra.mxu0 0.0
  %57 = vmatpush.msra.mxu0 0.0
  %58 = vmatpush.msra.mxu0 0.0
  %59 = vmatpush.msra.mxu0 0.0
  %60 = vmatpush.msra.mxu0 0.0
  %61 = vmatpush.msra.mxu0 0.0
  %62 = vmatpush.msra.mxu0 0.0
  %63 = vmatpush.msra.mxu0 0.0
  %64 = vmatpush.msra.mxu0 0.0
  %65 = vmatpush.msra.mxu0 0.0
  %66 = vmatpush.msra.mxu0 0.0
  %67 = vmatpush.msra.mxu0 0.0
  %68 = vmatpush.msra.mxu0 0.0
  %69 = vmatpush.msra.mxu0 %v45
  %70 = vmatmul.f32.gmra.mxu0 %v52
  %v71 = vpop.f32.mrf.mxu0
  %v72 = vadd.f32 %v48, %v71
  %73 = vdwg.mxu0
  %v74 = vmax.f32 %v72, 0.0
  %v75 = vld [vmem:[%s3] sm:$0xff]
  %v76 = vld [vmem:[%s3 + $0x8] sm:$0xff]
  %v77 = vld [vmem:[%s4] sm:$0x1]
  %v79 = vperm.slane %v77, 0
  %vm81 = vcmask 130048
  %v83 = vsel %vm81, %v74, 0
  %85 = vmatpush.msra.mxu0 0.0
  %86 = vmatpush.msra.mxu0 0.0
  %87 = vmatpush.msra.mxu0 0.0
  %88 = vmatpush.msra.mxu0 0.0
  %89 = vmatpush.msra.mxu0 0.0
  %90 = vmatpush.msra.mxu0 0.0
  %91 = vmatpush.msra.mxu0 0.0
  %92 = vmatpush.msra.mxu0 0.0
  %93 = vmatpush.msra.mxu0 0.0
  %94 = vmatpush.msra.mxu0 0.0
  %95 = vmatpush.msra.mxu0 0.0
  %96 = vmatpush.msra.mxu0 0.0
  %97 = vmatpush.msra.mxu0 0.0
  %98 = vmatpush.msra.mxu0 0.0
  %99 = vmatpush.msra.mxu0 %v76
  %100 = vmatpush.msra.mxu0 %v75
  %101 = vmatmul.f32.gmra.mxu0 %v83
  %v102 = vpop.f32.mrf.mxu0
  %v103 = vadd.f32 %v79, %v102
  %104 = vdwg.mxu0
  %v105 = vmax.f32 %v103, 0.0
  %v106 = vld [vmem:[%s5] sm:$0xff]
  %v107 = vld [vmem:[%s5 + $0x8] sm:$0xff]
  %v108 = vld [vmem:[%s5 + $0x10] sm:$0xff]
  %v109 = vld [vmem:[%s5 + $0x18] sm:$0xff]
  %v110 = vld [vmem:[%s6] sm:$0xff]
  %v111 = vld [vmem:[%s6 + $0x8] sm:$0xff]
  %v112 = vld [vmem:[%s6 + $0x10] sm:$0xff]
  %v113 = vld [vmem:[%s6 + $0x18] sm:$0xff]
  %v114 = vld [vmem:[%s7] sm:$0x1]
  %v116 = vperm.slane %v114, 0
  %vm118 = vcmask 261120
  %v120 = vsel %vm118, %v105, 0
  %122 = vmatpush.msra.mxu0 0.0
  %123 = vmatpush.msra.mxu0 0.0
  %124 = vmatpush.msra.mxu0 0.0
  %125 = vmatpush.msra.mxu0 0.0
  %126 = vmatpush.msra.mxu0 0.0
  %127 = vmatpush.msra.mxu0 0.0
  %128 = vmatpush.msra.mxu0 0.0
  %129 = vmatpush.msra.mxu0 0.0
  %130 = vmatpush.msra.mxu0 0.0
  %131 = vmatpush.msra.mxu0 0.0
  %132 = vmatpush.msra.mxu0 0.0
  %133 = vmatpush.msra.mxu0 0.0
  %134 = vmatpush.msra.mxu0 %v109
  %135 = vmatpush.msra.mxu0 %v108
  %136 = vmatpush.msra.mxu0 %v107
  %137 = vmatpush.msra.mxu0 %v106
  %138 = vmatmul.f32.gmra.mxu0 %v120
  %v139 = vpop.f32.mrf.mxu0
  %v140 = vadd.f32 %v116, %v139
  %141 = vdwg.mxu0
  %v143 = vsel %vm118, 0.0, 0
  %145 = vmatpush.msra.mxu0 0.0
  %146 = vmatpush.msra.mxu0 0.0
  %147 = vmatpush.msra.mxu0 0.0
  %148 = vmatpush.msra.mxu0 0.0
  %149 = vmatpush.msra.mxu0 0.0
  %150 = vmatpush.msra.mxu0 0.0
  %151 = vmatpush.msra.mxu0 0.0
  %152 = vmatpush.msra.mxu0 0.0
  %153 = vmatpush.msra.mxu0 0.0
  %154 = vmatpush.msra.mxu0 0.0
  %155 = vmatpush.msra.mxu0 0.0
  %156 = vmatpush.msra.mxu0 0.0
  %157 = vmatpush.msra.mxu0 %v113
  %158 = vmatpush.msra.mxu0 %v112
  %159 = vmatpush.msra.mxu0 %v111
  %160 = vmatpush.msra.mxu0 %v110
  %161 = vmatmul.f32.gmra.mxu0 %v143
  %v162 = vpop.f32.mrf.mxu0
  %v163 = vadd.f32 0.0, %v162
  %164 = vdwg.mxu0
  %v165 = vadd.f32 %v140, %v163
  %v166 = vxor.u32 %v165, 2147483648
  %v167 = vmul.f32 %v166, 1.442695
  %v168 = vpow.pop %v167
  %v169 = vadd.f32 %v168, 1.0
  %v170 = vrcp.pop %v169
  %v171 = vmul.f32 %v169, %v170
  %v172 = vsub.f32 1.0, %v171
  %v173 = vmul.f32 %v170, %v172
  %v174 = vadd.f32 %v170, %v173
  %vm175 = vweird.f32 %v169
  %vm176 = vweird.f32 %v170
  %vm177 = vmor %vm175, %vm176
  %v178 = vsel %vm177, %v170, %v174
  %v179 = vand.u32 2147483647, %v169
  %vm180 = vcmp.eq.f32.partialorder %v179, 8.507059e+37
  %v181 = vand.u32 %v169, 2147483648
  %v182 = vor.u32 1.1754944e-38, %v181
  %v183 = vsel %vm180, %v182, %v178
  %v184 = vmul.f32 1.0, %v183
  %v185 = vtanh.pop %v165
  %v186 = vmul.f32 %v184, 0.0
  %188 = vrot.lane.b32.xlu0 %v185, 64
  %v189 = vpop.permute.xlu0 %188
  %v191 = vmul.f32 %v184, %v189
  %193 = vrot.lane.b32.xlu0 %v191, 32
  %v194 = vpop.permute.xlu0 %193
  %v196 = vadd.f32 %v186, %v194
  %v197 = vtanh.pop %v196
  %199 = vrot.lane.b32.xlu0 %v197, 64
  %v200 = vpop.permute.xlu0 %199
  %v202 = vmul.f32 %v184, %v200
  %204 = vrot.lane.b32.xlu0 %v202, 32
  %v205 = vpop.permute.xlu0 %204
  %v206 = vsel %vm118, %v205, 0
  %208 = vmatpush.msra.mxu0 0.0
  %209 = vmatpush.msra.mxu0 0.0
  %210 = vmatpush.msra.mxu0 0.0
  %211 = vmatpush.msra.mxu0 0.0
  %212 = vmatpush.msra.mxu0 0.0
  %213 = vmatpush.msra.mxu0 0.0
  %214 = vmatpush.msra.mxu0 0.0
  %215 = vmatpush.msra.mxu0 0.0
  %216 = vmatpush.msra.mxu0 0.0
  %217 = vmatpush.msra.mxu0 0.0
  %218 = vmatpush.msra.mxu0 0.0
  %219 = vmatpush.msra.mxu0 0.0
  %220 = vmatpush.msra.mxu0 %v113
  %221 = vmatpush.msra.mxu0 %v112
  %222 = vmatpush.msra.mxu0 %v111
  %223 = vmatpush.msra.mxu0 %v110
  %224 = vmatmul.f32.gmra.mxu0 %v206
  %v225 = vpop.f32.mrf.mxu0
  %v226 = vadd.f32 0.0, %v225
  %227 = vdwg.mxu0
  %v228 = vadd.f32 %v140, %v226
  %v229 = vxor.u32 %v228, 2147483648
  %v230 = vmul.f32 %v229, 1.442695
  %v231 = vpow.pop %v230
  %v232 = vadd.f32 %v231, 1.0
  %v233 = vrcp.pop %v232
  %v234 = vmul.f32 %v232, %v233
  %v235 = vsub.f32 1.0, %v234
  %v236 = vmul.f32 %v233, %v235
  %v237 = vadd.f32 %v233, %v236
  %vm238 = vweird.f32 %v232
  %vm239 = vweird.f32 %v233
  %vm240 = vmor %vm238, %vm239
  %v241 = vsel %vm240, %v233, %v237
  %v242 = vand.u32 2147483647, %v232
  %vm243 = vcmp.eq.f32.partialorder %v242, 8.507059e+37
  %v244 = vand.u32 %v232, 2147483648
  %v245 = vor.u32 1.1754944e-38, %v244
  %v246 = vsel %vm243, %v245, %v241
  %v247 = vmul.f32 1.0, %v246
  %v248 = vtanh.pop %v228
  %v249 = vmul.f32 %v247, %v196
  %251 = vrot.lane.b32.xlu0 %v248, 64
  %v252 = vpop.permute.xlu0 %251
  %v254 = vmul.f32 %v247, %v252
  %256 = vrot.lane.b32.xlu0 %v254, 32
  %v257 = vpop.permute.xlu0 %256
  %v259 = vadd.f32 %v249, %v257
  %v260 = vtanh.pop %v259
  %262 = vrot.lane.b32.xlu0 %v260, 64
  %v263 = vpop.permute.xlu0 %262
  %v265 = vmul.f32 %v247, %v263
  %267 = vrot.lane.b32.xlu0 %v265, 32
  %v268 = vpop.permute.xlu0 %267
  %v269 = vsel %vm118, %v268, 0
  %271 = vmatpush.msra.mxu0 0.0
  %272 = vmatpush.msra.mxu0 0.0
  %273 = vmatpush.msra.mxu0 0.0
  %274 = vmatpush.msra.mxu0 0.0
  %275 = vmatpush.msra.mxu0 0.0
  %276 = vmatpush.msra.mxu0 0.0
  %277 = vmatpush.msra.mxu0 0.0
  %278 = vmatpush.msra.mxu0 0.0
  %279 = vmatpush.msra.mxu0 0.0
  %280 = vmatpush.msra.mxu0 0.0
  %281 = vmatpush.msra.mxu0 0.0
  %282 = vmatpush.msra.mxu0 0.0
  %283 = vmatpush.msra.mxu0 %v113
  %284 = vmatpush.msra.mxu0 %v112
  %285 = vmatpush.msra.mxu0 %v111
  %286 = vmatpush.msra.mxu0 %v110
  %287 = vmatmul.f32.gmra.mxu0 %v269
  %v288 = vpop.f32.mrf.mxu0
  %v289 = vadd.f32 0.0, %v288
  %290 = vdwg.mxu0
  %v291 = vadd.f32 %v140, %v289
  %v292 = vxor.u32 %v291, 2147483648
  %v293 = vmul.f32 %v292, 1.442695
  %v294 = vpow.pop %v293
  %v295 = vadd.f32 %v294, 1.0
  %v296 = vrcp.pop %v295
  %v297 = vmul.f32 %v295, %v296
  %v298 = vsub.f32 1.0, %v297
  %v299 = vmul.f32 %v296, %v298
  %v300 = vadd.f32 %v296, %v299
  %vm301 = vweird.f32 %v295
  %vm302 = vweird.f32 %v296
  %vm303 = vmor %vm301, %vm302
  %v304 = vsel %vm303, %v296, %v300
  %v305 = vand.u32 2147483647, %v295
  %vm306 = vcmp.eq.f32.partialorder %v305, 8.507059e+37
  %v307 = vand.u32 %v295, 2147483648
  %v308 = vor.u32 1.1754944e-38, %v307
  %v309 = vsel %vm306, %v308, %v304
  %v310 = vmul.f32 1.0, %v309
  %v311 = vtanh.pop %v291
  %v312 = vmul.f32 %v310, %v259
  %314 = vrot.lane.b32.xlu0 %v311, 64
  %v315 = vpop.permute.xlu0 %314
  %v317 = vmul.f32 %v310, %v315
  %319 = vrot.lane.b32.xlu0 %v317, 32
  %v320 = vpop.permute.xlu0 %319
  %v322 = vadd.f32 %v312, %v320
  %v323 = vtanh.pop %v322
  %325 = vrot.lane.b32.xlu0 %v323, 64
  %v326 = vpop.permute.xlu0 %325
  %v328 = vmul.f32 %v310, %v326
  %330 = vrot.lane.b32.xlu0 %v328, 32
  %v331 = vpop.permute.xlu0 %330
  %v332 = vsel %vm118, %v331, 0
  %334 = vmatpush.msra.mxu0 0.0
  %335 = vmatpush.msra.mxu0 0.0
  %336 = vmatpush.msra.mxu0 0.0
  %337 = vmatpush.msra.mxu0 0.0
  %338 = vmatpush.msra.mxu0 0.0
  %339 = vmatpush.msra.mxu0 0.0
  %340 = vmatpush.msra.mxu0 0.0
  %341 = vmatpush.msra.mxu0 0.0
  %342 = vmatpush.msra.mxu0 0.0
  %343 = vmatpush.msra.mxu0 0.0
  %344 = vmatpush.msra.mxu0 0.0
  %345 = vmatpush.msra.mxu0 0.0
  %346 = vmatpush.msra.mxu0 %v113
  %347 = vmatpush.msra.mxu0 %v112
  %348 = vmatpush.msra.mxu0 %v111
  %349 = vmatpush.msra.mxu0 %v110
  %350 = vmatmul.f32.gmra.mxu0 %v332
  %v351 = vpop.f32.mrf.mxu0
  %v352 = vadd.f32 0.0, %v351
  %353 = vdwg.mxu0
  %v354 = vadd.f32 %v140, %v352
  %v355 = vxor.u32 %v354, 2147483648
  %v356 = vmul.f32 %v355, 1.442695
  %v357 = vpow.pop %v356
  %v358 = vadd.f32 %v357, 1.0
  %v359 = vrcp.pop %v358
  %v360 = vmul.f32 %v358, %v359
  %v361 = vsub.f32 1.0, %v360
  %v362 = vmul.f32 %v359, %v361
  %v363 = vadd.f32 %v359, %v362
  %vm364 = vweird.f32 %v358
  %vm365 = vweird.f32 %v359
  %vm366 = vmor %vm364, %vm365
  %v367 = vsel %vm366, %v359, %v363
  %v368 = vand.u32 2147483647, %v358
  %vm369 = vcmp.eq.f32.partialorder %v368, 8.507059e+37
  %v370 = vand.u32 %v358, 2147483648
  %v371 = vor.u32 1.1754944e-38, %v370
  %v372 = vsel %vm369, %v371, %v367
  %v373 = vmul.f32 1.0, %v372
  %v374 = vtanh.pop %v354
  %v375 = vmul.f32 %v373, %v322
  %377 = vrot.lane.b32.xlu0 %v374, 64
  %v378 = vpop.permute.xlu0 %377
  %v380 = vmul.f32 %v373, %v378
  %382 = vrot.lane.b32.xlu0 %v380, 32
  %v383 = vpop.permute.xlu0 %382
  %v385 = vadd.f32 %v375, %v383
  %v386 = vtanh.pop %v385
  %388 = vrot.lane.b32.xlu0 %v386, 64
  %v389 = vpop.permute.xlu0 %388
  %v391 = vmul.f32 %v373, %v389
  %393 = vrot.lane.b32.xlu0 %v391, 32
  %v394 = vpop.permute.xlu0 %393
  %v395 = vsel %vm118, %v394, 0
  %397 = vmatpush.msra.mxu0 0.0
  %398 = vmatpush.msra.mxu0 0.0
  %399 = vmatpush.msra.mxu0 0.0
  %400 = vmatpush.msra.mxu0 0.0
  %401 = vmatpush.msra.mxu0 0.0
  %402 = vmatpush.msra.mxu0 0.0
  %403 = vmatpush.msra.mxu0 0.0
  %404 = vmatpush.msra.mxu0 0.0
  %405 = vmatpush.msra.mxu0 0.0
  %406 = vmatpush.msra.mxu0 0.0
  %407 = vmatpush.msra.mxu0 0.0
  %408 = vmatpush.msra.mxu0 0.0
  %409 = vmatpush.msra.mxu0 %v113
  %410 = vmatpush.msra.mxu0 %v112
  %411 = vmatpush.msra.mxu0 %v111
  %412 = vmatpush.msra.mxu0 %v110
  %413 = vmatmul.f32.gmra.mxu0 %v395
  %v414 = vpop.f32.mrf.mxu0
  %v415 = vadd.f32 0.0, %v414
  %416 = vdwg.mxu0
  %v417 = vadd.f32 %v140, %v415
  %v418 = vxor.u32 %v417, 2147483648
  %v419 = vmul.f32 %v418, 1.442695
  %v420 = vpow.pop %v419
  %v421 = vadd.f32 %v420, 1.0
  %v422 = vrcp.pop %v421
  %v423 = vmul.f32 %v421, %v422
  %v424 = vsub.f32 1.0, %v423
  %v425 = vmul.f32 %v422, %v424
  %v426 = vadd.f32 %v422, %v425
  %vm427 = vweird.f32 %v421
  %vm428 = vweird.f32 %v422
  %vm429 = vmor %vm427, %vm428
  %v430 = vsel %vm429, %v422, %v426
  %v431 = vand.u32 2147483647, %v421
  %vm432 = vcmp.eq.f32.partialorder %v431, 8.507059e+37
  %v433 = vand.u32 %v421, 2147483648
  %v434 = vor.u32 1.1754944e-38, %v433
  %v435 = vsel %vm432, %v434, %v430
  %v436 = vmul.f32 1.0, %v435
  %v437 = vtanh.pop %v417
  %v438 = vmul.f32 %v436, %v385
  %440 = vrot.lane.b32.xlu0 %v437, 64
  %v441 = vpop.permute.xlu0 %440
  %v443 = vmul.f32 %v436, %v441
  %445 = vrot.lane.b32.xlu0 %v443, 32
  %v446 = vpop.permute.xlu0 %445
  %v448 = vadd.f32 %v438, %v446
  %v449 = vtanh.pop %v448
  %451 = vrot.lane.b32.xlu0 %v449, 64
  %v452 = vpop.permute.xlu0 %451
  %v454 = vmul.f32 %v436, %v452
  %456 = vrot.lane.b32.xlu0 %v454, 32
  %v457 = vpop.permute.xlu0 %456
  %v458 = vsel %vm118, %v457, 0
  %460 = vmatpush.msra.mxu0 0.0
  %461 = vmatpush.msra.mxu0 0.0
  %462 = vmatpush.msra.mxu0 0.0
  %463 = vmatpush.msra.mxu0 0.0
  %464 = vmatpush.msra.mxu0 0.0
  %465 = vmatpush.msra.mxu0 0.0
  %466 = vmatpush.msra.mxu0 0.0
  %467 = vmatpush.msra.mxu0 0.0
  %468 = vmatpush.msra.mxu0 0.0
  %469 = vmatpush.msra.mxu0 0.0
  %470 = vmatpush.msra.mxu0 0.0
  %471 = vmatpush.msra.mxu0 0.0
  %472 = vmatpush.msra.mxu0 %v113
  %473 = vmatpush.msra.mxu0 %v112
  %474 = vmatpush.msra.mxu0 %v111
  %475 = vmatpush.msra.mxu0 %v110
  %476 = vmatmul.f32.gmra.mxu0 %v458
  %v477 = vpop.f32.mrf.mxu0
  %v478 = vadd.f32 0.0, %v477
  %479 = vdwg.mxu0
  %v480 = vadd.f32 %v140, %v478
  %v481 = vxor.u32 %v480, 2147483648
  %v482 = vmul.f32 %v481, 1.442695
  %v483 = vpow.pop %v482
  %v484 = vadd.f32 %v483, 1.0
  %v485 = vrcp.pop %v484
  %v486 = vmul.f32 %v484, %v485
  %v487 = vsub.f32 1.0, %v486
  %v488 = vmul.f32 %v485, %v487
  %v489 = vadd.f32 %v485, %v488
  %vm490 = vweird.f32 %v484
  %vm491 = vweird.f32 %v485
  %vm492 = vmor %vm490, %vm491
  %v493 = vsel %vm492, %v485, %v489
  %v494 = vand.u32 2147483647, %v484
  %vm495 = vcmp.eq.f32.partialorder %v494, 8.507059e+37
  %v496 = vand.u32 %v484, 2147483648
  %v497 = vor.u32 1.1754944e-38, %v496
  %v498 = vsel %vm495, %v497, %v493
  %v499 = vmul.f32 1.0, %v498
  %v500 = vtanh.pop %v480
  %v501 = vmul.f32 %v499, %v448
  %503 = vrot.lane.b32.xlu0 %v500, 64
  %v504 = vpop.permute.xlu0 %503
  %v506 = vmul.f32 %v499, %v504
  %508 = vrot.lane.b32.xlu0 %v506, 32
  %v509 = vpop.permute.xlu0 %508
  %v511 = vadd.f32 %v501, %v509
  %v512 = vtanh.pop %v511
  %514 = vrot.lane.b32.xlu0 %v512, 64
  %v515 = vpop.permute.xlu0 %514
  %v517 = vmul.f32 %v499, %v515
  %519 = vrot.lane.b32.xlu0 %v517, 32
  %v520 = vpop.permute.xlu0 %519
  %v521 = vsel %vm118, %v520, 0
  %523 = vmatpush.msra.mxu0 0.0
  %524 = vmatpush.msra.mxu0 0.0
  %525 = vmatpush.msra.mxu0 0.0
  %526 = vmatpush.msra.mxu0 0.0
  %527 = vmatpush.msra.mxu0 0.0
  %528 = vmatpush.msra.mxu0 0.0
  %529 = vmatpush.msra.mxu0 0.0
  %530 = vmatpush.msra.mxu0 0.0
  %531 = vmatpush.msra.mxu0 0.0
  %532 = vmatpush.msra.mxu0 0.0
  %533 = vmatpush.msra.mxu0 0.0
  %534 = vmatpush.msra.mxu0 0.0
  %535 = vmatpush.msra.mxu0 %v113
  %536 = vmatpush.msra.mxu0 %v112
  %537 = vmatpush.msra.mxu0 %v111
  %538 = vmatpush.msra.mxu0 %v110
  %539 = vmatmul.f32.gmra.mxu0 %v521
  %v540 = vpop.f32.mrf.mxu0
  %v541 = vadd.f32 0.0, %v540
  %542 = vdwg.mxu0
  %v543 = vadd.f32 %v140, %v541
  %v544 = vxor.u32 %v543, 2147483648
  %v545 = vmul.f32 %v544, 1.442695
  %v546 = vpow.pop %v545
  %v547 = vadd.f32 %v546, 1.0
  %v548 = vrcp.pop %v547
  %v549 = vmul.f32 %v547, %v548
  %v550 = vsub.f32 1.0, %v549
  %v551 = vmul.f32 %v548, %v550
  %v552 = vadd.f32 %v548, %v551
  %vm553 = vweird.f32 %v547
  %vm554 = vweird.f32 %v548
  %vm555 = vmor %vm553, %vm554
  %v556 = vsel %vm555, %v548, %v552
  %v557 = vand.u32 2147483647, %v547
  %vm558 = vcmp.eq.f32.partialorder %v557, 8.507059e+37
  %v559 = vand.u32 %v547, 2147483648
  %v560 = vor.u32 1.1754944e-38, %v559
  %v561 = vsel %vm558, %v560, %v556
  %v562 = vmul.f32 1.0, %v561
  %v563 = vtanh.pop %v543
  %v564 = vmul.f32 %v562, %v511
  %566 = vrot.lane.b32.xlu0 %v563, 64
  %v567 = vpop.permute.xlu0 %566
  %v569 = vmul.f32 %v562, %v567
  %571 = vrot.lane.b32.xlu0 %v569, 32
  %v572 = vpop.permute.xlu0 %571
  %v574 = vadd.f32 %v564, %v572
  %v575 = vtanh.pop %v574
  %577 = vrot.lane.b32.xlu0 %v575, 64
  %v578 = vpop.permute.xlu0 %577
  %v580 = vmul.f32 %v562, %v578
  %582 = vrot.lane.b32.xlu0 %v580, 32
  %v583 = vpop.permute.xlu0 %582
  %v584 = vsel %vm118, %v583, 0
  %586 = vmatpush.msra.mxu0 0.0
  %587 = vmatpush.msra.mxu0 0.0
  %588 = vmatpush.msra.mxu0 0.0
  %589 = vmatpush.msra.mxu0 0.0
  %590 = vmatpush.msra.mxu0 0.0
  %591 = vmatpush.msra.mxu0 0.0
  %592 = vmatpush.msra.mxu0 0.0
  %593 = vmatpush.msra.mxu0 0.0
  %594 = vmatpush.msra.mxu0 0.0
  %595 = vmatpush.msra.mxu0 0.0
  %596 = vmatpush.msra.mxu0 0.0
  %597 = vmatpush.msra.mxu0 0.0
  %598 = vmatpush.msra.mxu0 %v113
  %599 = vmatpush.msra.mxu0 %v112
  %600 = vmatpush.msra.mxu0 %v111
  %601 = vmatpush.msra.mxu0 %v110
  %602 = vmatmul.f32.gmra.mxu0 %v584
  %v603 = vpop.f32.mrf.mxu0
  %v604 = vadd.f32 0.0, %v603
  %605 = vdwg.mxu0
  %v606 = vadd.f32 %v140, %v604
  %v607 = vxor.u32 %v606, 2147483648
  %v608 = vmul.f32 %v607, 1.442695
  %v609 = vpow.pop %v608
  %v610 = vadd.f32 %v609, 1.0
  %v611 = vrcp.pop %v610
  %v612 = vmul.f32 %v610, %v611
  %v613 = vsub.f32 1.0, %v612
  %v614 = vmul.f32 %v611, %v613
  %v615 = vadd.f32 %v611, %v614
  %vm616 = vweird.f32 %v610
  %vm617 = vweird.f32 %v611
  %vm618 = vmor %vm616, %vm617
  %v619 = vsel %vm618, %v611, %v615
  %v620 = vand.u32 2147483647, %v610
  %vm621 = vcmp.eq.f32.partialorder %v620, 8.507059e+37
  %v622 = vand.u32 %v610, 2147483648
  %v623 = vor.u32 1.1754944e-38, %v622
  %v624 = vsel %vm621, %v623, %v619
  %v625 = vmul.f32 1.0, %v624
  %v626 = vtanh.pop %v606
  %v627 = vmul.f32 %v625, %v574
  %629 = vrot.lane.b32.xlu0 %v626, 64
  %v630 = vpop.permute.xlu0 %629
  %v632 = vmul.f32 %v625, %v630
  %634 = vrot.lane.b32.xlu0 %v632, 32
  %v635 = vpop.permute.xlu0 %634
  %v637 = vadd.f32 %v627, %v635
  %v638 = vtanh.pop %v637
  %640 = vrot.lane.b32.xlu0 %v638, 64
  %v641 = vpop.permute.xlu0 %640
  %v643 = vmul.f32 %v625, %v641
  %v644 = vld [vmem:[%s8] sm:$0xff]
  %v645 = vld [vmem:[%s8 + $0x8] sm:$0xff]
  %v646 = vld [vmem:[%s8 + $0x10] sm:$0xff]
  %v647 = vld [vmem:[%s8 + $0x18] sm:$0xff]
  %v648 = vld [vmem:[%s9] sm:$0xff]
  %v649 = vld [vmem:[%s9 + $0x8] sm:$0xff]
  %v650 = vld [vmem:[%s9 + $0x10] sm:$0xff]
  %v651 = vld [vmem:[%s9 + $0x18] sm:$0xff]
  %v652 = vld [vmem:[%s10] sm:$0x1]
  %v654 = vperm.slane %v652, 0
  %657 = vrot.lane.b32.xlu0 %v643, 32
  %v658 = vpop.permute.xlu0 %657
  %v659 = vsel %vm118, %v658, 0
  %661 = vmatpush.msra.mxu0 0.0
  %662 = vmatpush.msra.mxu0 0.0
  %663 = vmatpush.msra.mxu0 0.0
  %664 = vmatpush.msra.mxu0 0.0
  %665 = vmatpush.msra.mxu0 0.0
  %666 = vmatpush.msra.mxu0 0.0
  %667 = vmatpush.msra.mxu0 0.0
  %668 = vmatpush.msra.mxu0 0.0
  %669 = vmatpush.msra.mxu0 0.0
  %670 = vmatpush.msra.mxu0 0.0
  %671 = vmatpush.msra.mxu0 0.0
  %672 = vmatpush.msra.mxu0 0.0
  %673 = vmatpush.msra.mxu0 %v647
  %674 = vmatpush.msra.mxu0 %v646
  %675 = vmatpush.msra.mxu0 %v645
  %676 = vmatpush.msra.mxu0 %v644
  %677 = vmatmul.f32.gmra.mxu0 %v206
  %v678 = vpop.f32.mrf.mxu0
  %v679 = vadd.f32 %v654, %v678
  %680 = vmatmul.f32.gmra.mxu0 %v269
  %v681 = vpop.f32.mrf.mxu0
  %v682 = vadd.f32 %v654, %v681
  %683 = vmatmul.f32.gmra.mxu0 %v332
  %v684 = vpop.f32.mrf.mxu0
  %v685 = vadd.f32 %v654, %v684
  %686 = vmatmul.f32.gmra.mxu0 %v395
  %v687 = vpop.f32.mrf.mxu0
  %v688 = vadd.f32 %v654, %v687
  %689 = vmatmul.f32.gmra.mxu0 %v458
  %v690 = vpop.f32.mrf.mxu0
  %v691 = vadd.f32 %v654, %v690
  %692 = vmatmul.f32.gmra.mxu0 %v521
  %v693 = vpop.f32.mrf.mxu0
  %v694 = vadd.f32 %v654, %v693
  %695 = vmatmul.f32.gmra.mxu0 %v584
  %v696 = vpop.f32.mrf.mxu0
  %v697 = vadd.f32 %v654, %v696
  %698 = vmatmul.f32.gmra.mxu0 %v659
  %v699 = vpop.f32.mrf.mxu0
  %v700 = vadd.f32 %v654, %v699
  %701 = vdwg.mxu0
  %702 = vmatpush.msra.mxu0 0.0
  %703 = vmatpush.msra.mxu0 0.0
  %704 = vmatpush.msra.mxu0 0.0
  %705 = vmatpush.msra.mxu0 0.0
  %706 = vmatpush.msra.mxu0 0.0
  %707 = vmatpush.msra.mxu0 0.0
  %708 = vmatpush.msra.mxu0 0.0
  %709 = vmatpush.msra.mxu0 0.0
  %710 = vmatpush.msra.mxu0 0.0
  %711 = vmatpush.msra.mxu0 0.0
  %712 = vmatpush.msra.mxu0 0.0
  %713 = vmatpush.msra.mxu0 0.0
  %714 = vmatpush.msra.mxu0 %v651
  %715 = vmatpush.msra.mxu0 %v650
  %716 = vmatpush.msra.mxu0 %v649
  %717 = vmatpush.msra.mxu0 %v648
  %718 = vmatmul.f32.gmra.mxu0 %v143
  %v719 = vpop.f32.mrf.mxu0
  %v720 = vadd.f32 0.0, %v719
  %721 = vdwg.mxu0
  %v722 = vadd.f32 %v679, %v720
  %v723 = vxor.u32 %v722, 2147483648
  %v724 = vmul.f32 %v723, 1.442695
  %v725 = vpow.pop %v724
  %v726 = vadd.f32 %v725, 1.0
  %v727 = vrcp.pop %v726
  %v728 = vmul.f32 %v726, %v727
  %v729 = vsub.f32 1.0, %v728
  %v730 = vmul.f32 %v727, %v729
  %v731 = vadd.f32 %v727, %v730
  %vm732 = vweird.f32 %v726
  %vm733 = vweird.f32 %v727
  %vm734 = vmor %vm732, %vm733
  %v735 = vsel %vm734, %v727, %v731
  %v736 = vand.u32 2147483647, %v726
  %vm737 = vcmp.eq.f32.partialorder %v736, 8.507059e+37
  %v738 = vand.u32 %v726, 2147483648
  %v739 = vor.u32 1.1754944e-38, %v738
  %v740 = vsel %vm737, %v739, %v735
  %v741 = vmul.f32 1.0, %v740
  %v742 = vtanh.pop %v722
  %v743 = vmul.f32 %v741, 0.0
  %745 = vrot.lane.b32.xlu0 %v742, 64
  %v746 = vpop.permute.xlu0 %745
  %v748 = vmul.f32 %v741, %v746
  %750 = vrot.lane.b32.xlu0 %v748, 32
  %v751 = vpop.permute.xlu0 %750
  %v753 = vadd.f32 %v743, %v751
  %v754 = vtanh.pop %v753
  %756 = vrot.lane.b32.xlu0 %v754, 64
  %v757 = vpop.permute.xlu0 %756
  %v759 = vmul.f32 %v741, %v757
  %761 = vrot.lane.b32.xlu0 %v759, 32
  %v762 = vpop.permute.xlu0 %761
  %v763 = vsel %vm118, %v762, 0
  %765 = vmatpush.msra.mxu0 0.0
  %766 = vmatpush.msra.mxu0 0.0
  %767 = vmatpush.msra.mxu0 0.0
  %768 = vmatpush.msra.mxu0 0.0
  %769 = vmatpush.msra.mxu0 0.0
  %770 = vmatpush.msra.mxu0 0.0
  %771 = vmatpush.msra.mxu0 0.0
  %772 = vmatpush.msra.mxu0 0.0
  %773 = vmatpush.msra.mxu0 0.0
  %774 = vmatpush.msra.mxu0 0.0
  %775 = vmatpush.msra.mxu0 0.0
  %776 = vmatpush.msra.mxu0 0.0
  %777 = vmatpush.msra.mxu0 %v651
  %778 = vmatpush.msra.mxu0 %v650
  %779 = vmatpush.msra.mxu0 %v649
  %780 = vmatpush.msra.mxu0 %v648
  %781 = vmatmul.f32.gmra.mxu0 %v763
  %v782 = vpop.f32.mrf.mxu0
  %v783 = vadd.f32 0.0, %v782
  %784 = vdwg.mxu0
  %v785 = vadd.f32 %v682, %v783
  %v786 = vxor.u32 %v785, 2147483648
  %v787 = vmul.f32 %v786, 1.442695
  %v788 = vpow.pop %v787
  %v789 = vadd.f32 %v788, 1.0
  %v790 = vrcp.pop %v789
  %v791 = vmul.f32 %v789, %v790
  %v792 = vsub.f32 1.0, %v791
  %v793 = vmul.f32 %v790, %v792
  %v794 = vadd.f32 %v790, %v793
  %vm795 = vweird.f32 %v789
  %vm796 = vweird.f32 %v790
  %vm797 = vmor %vm795, %vm796
  %v798 = vsel %vm797, %v790, %v794
  %v799 = vand.u32 2147483647, %v789
  %vm800 = vcmp.eq.f32.partialorder %v799, 8.507059e+37
  %v801 = vand.u32 %v789, 2147483648
  %v802 = vor.u32 1.1754944e-38, %v801
  %v803 = vsel %vm800, %v802, %v798
  %v804 = vmul.f32 1.0, %v803
  %v805 = vtanh.pop %v785
  %v806 = vmul.f32 %v804, %v753
  %808 = vrot.lane.b32.xlu0 %v805, 64
  %v809 = vpop.permute.xlu0 %808
  %v811 = vmul.f32 %v804, %v809
  %813 = vrot.lane.b32.xlu0 %v811, 32
  %v814 = vpop.permute.xlu0 %813
  %v816 = vadd.f32 %v806, %v814
  %v817 = vtanh.pop %v816
  %819 = vrot.lane.b32.xlu0 %v817, 64
  %v820 = vpop.permute.xlu0 %819
  %v822 = vmul.f32 %v804, %v820
  %824 = vrot.lane.b32.xlu0 %v822, 32
  %v825 = vpop.permute.xlu0 %824
  %v826 = vsel %vm118, %v825, 0
  %828 = vmatpush.msra.mxu0 0.0
  %829 = vmatpush.msra.mxu0 0.0
  %830 = vmatpush.msra.mxu0 0.0
  %831 = vmatpush.msra.mxu0 0.0
  %832 = vmatpush.msra.mxu0 0.0
  %833 = vmatpush.msra.mxu0 0.0
  %834 = vmatpush.msra.mxu0 0.0
  %835 = vmatpush.msra.mxu0 0.0
  %836 = vmatpush.msra.mxu0 0.0
  %837 = vmatpush.msra.mxu0 0.0
  %838 = vmatpush.msra.mxu0 0.0
  %839 = vmatpush.msra.mxu0 0.0
  %840 = vmatpush.msra.mxu0 %v651
  %841 = vmatpush.msra.mxu0 %v650
  %842 = vmatpush.msra.mxu0 %v649
  %843 = vmatpush.msra.mxu0 %v648
  %844 = vmatmul.f32.gmra.mxu0 %v826
  %v845 = vpop.f32.mrf.mxu0
  %v846 = vadd.f32 0.0, %v845
  %847 = vdwg.mxu0
  %v848 = vadd.f32 %v685, %v846
  %v849 = vxor.u32 %v848, 2147483648
  %v850 = vmul.f32 %v849, 1.442695
  %v851 = vpow.pop %v850
  %v852 = vadd.f32 %v851, 1.0
  %v853 = vrcp.pop %v852
  %v854 = vmul.f32 %v852, %v853
  %v855 = vsub.f32 1.0, %v854
  %v856 = vmul.f32 %v853, %v855
  %v857 = vadd.f32 %v853, %v856
  %vm858 = vweird.f32 %v852
  %vm859 = vweird.f32 %v853
  %vm860 = vmor %vm858, %vm859
  %v861 = vsel %vm860, %v853, %v857
  %v862 = vand.u32 2147483647, %v852
  %vm863 = vcmp.eq.f32.partialorder %v862, 8.507059e+37
  %v864 = vand.u32 %v852, 2147483648
  %v865 = vor.u32 1.1754944e-38, %v864
  %v866 = vsel %vm863, %v865, %v861
  %v867 = vmul.f32 1.0, %v866
  %v868 = vtanh.pop %v848
  %v869 = vmul.f32 %v867, %v816
  %871 = vrot.lane.b32.xlu0 %v868, 64
  %v872 = vpop.permute.xlu0 %871
  %v874 = vmul.f32 %v867, %v872
  %876 = vrot.lane.b32.xlu0 %v874, 32
  %v877 = vpop.permute.xlu0 %876
  %v879 = vadd.f32 %v869, %v877
  %v880 = vtanh.pop %v879
  %882 = vrot.lane.b32.xlu0 %v880, 64
  %v883 = vpop.permute.xlu0 %882
  %v885 = vmul.f32 %v867, %v883
  %887 = vrot.lane.b32.xlu0 %v885, 32
  %v888 = vpop.permute.xlu0 %887
  %v889 = vsel %vm118, %v888, 0
  %891 = vmatpush.msra.mxu0 0.0
  %892 = vmatpush.msra.mxu0 0.0
  %893 = vmatpush.msra.mxu0 0.0
  %894 = vmatpush.msra.mxu0 0.0
  %895 = vmatpush.msra.mxu0 0.0
  %896 = vmatpush.msra.mxu0 0.0
  %897 = vmatpush.msra.mxu0 0.0
  %898 = vmatpush.msra.mxu0 0.0
  %899 = vmatpush.msra.mxu0 0.0
  %900 = vmatpush.msra.mxu0 0.0
  %901 = vmatpush.msra.mxu0 0.0
  %902 = vmatpush.msra.mxu0 0.0
  %903 = vmatpush.msra.mxu0 %v651
  %904 = vmatpush.msra.mxu0 %v650
  %905 = vmatpush.msra.mxu0 %v649
  %906 = vmatpush.msra.mxu0 %v648
  %907 = vmatmul.f32.gmra.mxu0 %v889
  %v908 = vpop.f32.mrf.mxu0
  %v909 = vadd.f32 0.0, %v908
  %910 = vdwg.mxu0
  %v911 = vadd.f32 %v688, %v909
  %v912 = vxor.u32 %v911, 2147483648
  %v913 = vmul.f32 %v912, 1.442695
  %v914 = vpow.pop %v913
  %v915 = vadd.f32 %v914, 1.0
  %v916 = vrcp.pop %v915
  %v917 = vmul.f32 %v915, %v916
  %v918 = vsub.f32 1.0, %v917
  %v919 = vmul.f32 %v916, %v918
  %v920 = vadd.f32 %v916, %v919
  %vm921 = vweird.f32 %v915
  %vm922 = vweird.f32 %v916
  %vm923 = vmor %vm921, %vm922
  %v924 = vsel %vm923, %v916, %v920
  %v925 = vand.u32 2147483647, %v915
  %vm926 = vcmp.eq.f32.partialorder %v925, 8.507059e+37
  %v927 = vand.u32 %v915, 2147483648
  %v928 = vor.u32 1.1754944e-38, %v927
  %v929 = vsel %vm926, %v928, %v924
  %v930 = vmul.f32 1.0, %v929
  %v931 = vtanh.pop %v911
  %v932 = vmul.f32 %v930, %v879
  %934 = vrot.lane.b32.xlu0 %v931, 64
  %v935 = vpop.permute.xlu0 %934
  %v937 = vmul.f32 %v930, %v935
  %939 = vrot.lane.b32.xlu0 %v937, 32
  %v940 = vpop.permute.xlu0 %939
  %v942 = vadd.f32 %v932, %v940
  %v943 = vtanh.pop %v942
  %945 = vrot.lane.b32.xlu0 %v943, 64
  %v946 = vpop.permute.xlu0 %945
  %v948 = vmul.f32 %v930, %v946
  %950 = vrot.lane.b32.xlu0 %v948, 32
  %v951 = vpop.permute.xlu0 %950
  %v952 = vsel %vm118, %v951, 0
  %954 = vmatpush.msra.mxu0 0.0
  %955 = vmatpush.msra.mxu0 0.0
  %956 = vmatpush.msra.mxu0 0.0
  %957 = vmatpush.msra.mxu0 0.0
  %958 = vmatpush.msra.mxu0 0.0
  %959 = vmatpush.msra.mxu0 0.0
  %960 = vmatpush.msra.mxu0 0.0
  %961 = vmatpush.msra.mxu0 0.0
  %962 = vmatpush.msra.mxu0 0.0
  %963 = vmatpush.msra.mxu0 0.0
  %964 = vmatpush.msra.mxu0 0.0
  %965 = vmatpush.msra.mxu0 0.0
  %966 = vmatpush.msra.mxu0 %v651
  %967 = vmatpush.msra.mxu0 %v650
  %968 = vmatpush.msra.mxu0 %v649
  %969 = vmatpush.msra.mxu0 %v648
  %970 = vmatmul.f32.gmra.mxu0 %v952
  %v971 = vpop.f32.mrf.mxu0
  %v972 = vadd.f32 0.0, %v971
  %973 = vdwg.mxu0
  %v974 = vadd.f32 %v691, %v972
  %v975 = vxor.u32 %v974, 2147483648
  %v976 = vmul.f32 %v975, 1.442695
  %v977 = vpow.pop %v976
  %v978 = vadd.f32 %v977, 1.0
  %v979 = vrcp.pop %v978
  %v980 = vmul.f32 %v978, %v979
  %v981 = vsub.f32 1.0, %v980
  %v982 = vmul.f32 %v979, %v981
  %v983 = vadd.f32 %v979, %v982
  %vm984 = vweird.f32 %v978
  %vm985 = vweird.f32 %v979
  %vm986 = vmor %vm984, %vm985
  %v987 = vsel %vm986, %v979, %v983
  %v988 = vand.u32 2147483647, %v978
  %vm989 = vcmp.eq.f32.partialorder %v988, 8.507059e+37
  %v990 = vand.u32 %v978, 2147483648
  %v991 = vor.u32 1.1754944e-38, %v990
  %v992 = vsel %vm989, %v991, %v987
  %v993 = vmul.f32 1.0, %v992
  %v994 = vtanh.pop %v974
  %v995 = vmul.f32 %v993, %v942
  %997 = vrot.lane.b32.xlu0 %v994, 64
  %v998 = vpop.permute.xlu0 %997
  %v1000 = vmul.f32 %v993, %v998
  %1002 = vrot.lane.b32.xlu0 %v1000, 32
  %v1003 = vpop.permute.xlu0 %1002
  %v1005 = vadd.f32 %v995, %v1003
  %v1006 = vtanh.pop %v1005
  %1008 = vrot.lane.b32.xlu0 %v1006, 64
  %v1009 = vpop.permute.xlu0 %1008
  %v1011 = vmul.f32 %v993, %v1009
  %1013 = vrot.lane.b32.xlu0 %v1011, 32
  %v1014 = vpop.permute.xlu0 %1013
  %v1015 = vsel %vm118, %v1014, 0
  %1017 = vmatpush.msra.mxu0 0.0
  %1018 = vmatpush.msra.mxu0 0.0
  %1019 = vmatpush.msra.mxu0 0.0
  %1020 = vmatpush.msra.mxu0 0.0
  %1021 = vmatpush.msra.mxu0 0.0
  %1022 = vmatpush.msra.mxu0 0.0
  %1023 = vmatpush.msra.mxu0 0.0
  %1024 = vmatpush.msra.mxu0 0.0
  %1025 = vmatpush.msra.mxu0 0.0
  %1026 = vmatpush.msra.mxu0 0.0
  %1027 = vmatpush.msra.mxu0 0.0
  %1028 = vmatpush.msra.mxu0 0.0
  %1029 = vmatpush.msra.mxu0 %v651
  %1030 = vmatpush.msra.mxu0 %v650
  %1031 = vmatpush.msra.mxu0 %v649
  %1032 = vmatpush.msra.mxu0 %v648
  %1033 = vmatmul.f32.gmra.mxu0 %v1015
  %v1034 = vpop.f32.mrf.mxu0
  %v1035 = vadd.f32 0.0, %v1034
  %1036 = vdwg.mxu0
  %v1037 = vadd.f32 %v694, %v1035
  %v1038 = vxor.u32 %v1037, 2147483648
  %v1039 = vmul.f32 %v1038, 1.442695
  %v1040 = vpow.pop %v1039
  %v1041 = vadd.f32 %v1040, 1.0
  %v1042 = vrcp.pop %v1041
  %v1043 = vmul.f32 %v1041, %v1042
  %v1044 = vsub.f32 1.0, %v1043
  %v1045 = vmul.f32 %v1042, %v1044
  %v1046 = vadd.f32 %v1042, %v1045
  %vm1047 = vweird.f32 %v1041
  %vm1048 = vweird.f32 %v1042
  %vm1049 = vmor %vm1047, %vm1048
  %v1050 = vsel %vm1049, %v1042, %v1046
  %v1051 = vand.u32 2147483647, %v1041
  %vm1052 = vcmp.eq.f32.partialorder %v1051, 8.507059e+37
  %v1053 = vand.u32 %v1041, 2147483648
  %v1054 = vor.u32 1.1754944e-38, %v1053
  %v1055 = vsel %vm1052, %v1054, %v1050
  %v1056 = vmul.f32 1.0, %v1055
  %v1057 = vtanh.pop %v1037
  %v1058 = vmul.f32 %v1056, %v1005
  %1060 = vrot.lane.b32.xlu0 %v1057, 64
  %v1061 = vpop.permute.xlu0 %1060
  %v1063 = vmul.f32 %v1056, %v1061
  %1065 = vrot.lane.b32.xlu0 %v1063, 32
  %v1066 = vpop.permute.xlu0 %1065
  %v1068 = vadd.f32 %v1058, %v1066
  %v1069 = vtanh.pop %v1068
  %1071 = vrot.lane.b32.xlu0 %v1069, 64
  %v1072 = vpop.permute.xlu0 %1071
  %v1074 = vmul.f32 %v1056, %v1072
  %1076 = vrot.lane.b32.xlu0 %v1074, 32
  %v1077 = vpop.permute.xlu0 %1076
  %v1078 = vsel %vm118, %v1077, 0
  %1080 = vmatpush.msra.mxu0 0.0
  %1081 = vmatpush.msra.mxu0 0.0
  %1082 = vmatpush.msra.mxu0 0.0
  %1083 = vmatpush.msra.mxu0 0.0
  %1084 = vmatpush.msra.mxu0 0.0
  %1085 = vmatpush.msra.mxu0 0.0
  %1086 = vmatpush.msra.mxu0 0.0
  %1087 = vmatpush.msra.mxu0 0.0
  %1088 = vmatpush.msra.mxu0 0.0
  %1089 = vmatpush.msra.mxu0 0.0
  %1090 = vmatpush.msra.mxu0 0.0
  %1091 = vmatpush.msra.mxu0 0.0
  %1092 = vmatpush.msra.mxu0 %v651
  %1093 = vmatpush.msra.mxu0 %v650
  %1094 = vmatpush.msra.mxu0 %v649
  %1095 = vmatpush.msra.mxu0 %v648
  %1096 = vmatmul.f32.gmra.mxu0 %v1078
  %v1097 = vpop.f32.mrf.mxu0
  %v1098 = vadd.f32 0.0, %v1097
  %1099 = vdwg.mxu0
  %v1100 = vadd.f32 %v697, %v1098
  %v1101 = vxor.u32 %v1100, 2147483648
  %v1102 = vmul.f32 %v1101, 1.442695
  %v1103 = vpow.pop %v1102
  %v1104 = vadd.f32 %v1103, 1.0
  %v1105 = vrcp.pop %v1104
  %v1106 = vmul.f32 %v1104, %v1105
  %v1107 = vsub.f32 1.0, %v1106
  %v1108 = vmul.f32 %v1105, %v1107
  %v1109 = vadd.f32 %v1105, %v1108
  %vm1110 = vweird.f32 %v1104
  %vm1111 = vweird.f32 %v1105
  %vm1112 = vmor %vm1110, %vm1111
  %v1113 = vsel %vm1112, %v1105, %v1109
  %v1114 = vand.u32 2147483647, %v1104
  %vm1115 = vcmp.eq.f32.partialorder %v1114, 8.507059e+37
  %v1116 = vand.u32 %v1104, 2147483648
  %v1117 = vor.u32 1.1754944e-38, %v1116
  %v1118 = vsel %vm1115, %v1117, %v1113
  %v1119 = vmul.f32 1.0, %v1118
  %v1120 = vtanh.pop %v1100
  %v1121 = vmul.f32 %v1119, %v1068
  %1123 = vrot.lane.b32.xlu0 %v1120, 64
  %v1124 = vpop.permute.xlu0 %1123
  %v1126 = vmul.f32 %v1119, %v1124
  %1128 = vrot.lane.b32.xlu0 %v1126, 32
  %v1129 = vpop.permute.xlu0 %1128
  %v1131 = vadd.f32 %v1121, %v1129
  %v1132 = vtanh.pop %v1131
  %1134 = vrot.lane.b32.xlu0 %v1132, 64
  %v1135 = vpop.permute.xlu0 %1134
  %v1137 = vmul.f32 %v1119, %v1135
  %1139 = vrot.lane.b32.xlu0 %v1137, 32
  %v1140 = vpop.permute.xlu0 %1139
  %v1141 = vsel %vm118, %v1140, 0
  %1143 = vmatpush.msra.mxu0 0.0
  %1144 = vmatpush.msra.mxu0 0.0
  %1145 = vmatpush.msra.mxu0 0.0
  %1146 = vmatpush.msra.mxu0 0.0
  %1147 = vmatpush.msra.mxu0 0.0
  %1148 = vmatpush.msra.mxu0 0.0
  %1149 = vmatpush.msra.mxu0 0.0
  %1150 = vmatpush.msra.mxu0 0.0
  %1151 = vmatpush.msra.mxu0 0.0
  %1152 = vmatpush.msra.mxu0 0.0
  %1153 = vmatpush.msra.mxu0 0.0
  %1154 = vmatpush.msra.mxu0 0.0
  %1155 = vmatpush.msra.mxu0 %v651
  %1156 = vmatpush.msra.mxu0 %v650
  %1157 = vmatpush.msra.mxu0 %v649
  %1158 = vmatpush.msra.mxu0 %v648
  %1159 = vmatmul.f32.gmra.mxu0 %v1141
  %v1160 = vpop.f32.mrf.mxu0
  %v1161 = vadd.f32 0.0, %v1160
  %1162 = vdwg.mxu0
  %v1163 = vadd.f32 %v700, %v1161
  %v1164 = vxor.u32 %v1163, 2147483648
  %v1165 = vmul.f32 %v1164, 1.442695
  %v1166 = vpow.pop %v1165
  %v1167 = vadd.f32 %v1166, 1.0
  %v1168 = vrcp.pop %v1167
  %v1169 = vmul.f32 %v1167, %v1168
  %v1170 = vsub.f32 1.0, %v1169
  %v1171 = vmul.f32 %v1168, %v1170
  %v1172 = vadd.f32 %v1168, %v1171
  %vm1173 = vweird.f32 %v1167
  %vm1174 = vweird.f32 %v1168
  %vm1175 = vmor %vm1173, %vm1174
  %v1176 = vsel %vm1175, %v1168, %v1172
  %v1177 = vand.u32 2147483647, %v1167
  %vm1178 = vcmp.eq.f32.partialorder %v1177, 8.507059e+37
  %v1179 = vand.u32 %v1167, 2147483648
  %v1180 = vor.u32 1.1754944e-38, %v1179
  %v1181 = vsel %vm1178, %v1180, %v1176
  %v1182 = vmul.f32 1.0, %v1181
  %v1183 = vtanh.pop %v1163
  %v1184 = vmul.f32 %v1182, %v1131
  %1186 = vrot.lane.b32.xlu0 %v1183, 64
  %v1187 = vpop.permute.xlu0 %1186
  %v1189 = vmul.f32 %v1182, %v1187
  %1191 = vrot.lane.b32.xlu0 %v1189, 32
  %v1192 = vpop.permute.xlu0 %1191
  %v1194 = vadd.f32 %v1184, %v1192
  %v1195 = vtanh.pop %v1194
  %1197 = vrot.lane.b32.xlu0 %v1195, 64
  %v1198 = vpop.permute.xlu0 %1197
  %v1200 = vmul.f32 %v1182, %v1198
  %v1201 = vld [vmem:[%s11] sm:$0xff]
  %v1202 = vld [vmem:[%s11 + $0x8] sm:$0xff]
  %v1203 = vld [vmem:[%s11 + $0x10] sm:$0xff]
  %v1204 = vld [vmem:[%s11 + $0x18] sm:$0xff]
  %v1205 = vld [vmem:[%s12] sm:$0x1]
  %v1207 = vperm.slane %v1205, 0
  %1210 = vrot.lane.b32.xlu0 %v1200, 32
  %v1211 = vpop.permute.xlu0 %1210
  %v1212 = vsel %vm118, %v1211, 0
  %1214 = vmatpush.msra.mxu0 0.0
  %1215 = vmatpush.msra.mxu0 0.0
  %1216 = vmatpush.msra.mxu0 0.0
  %1217 = vmatpush.msra.mxu0 0.0
  %1218 = vmatpush.msra.mxu0 0.0
  %1219 = vmatpush.msra.mxu0 0.0
  %1220 = vmatpush.msra.mxu0 0.0
  %1221 = vmatpush.msra.mxu0 0.0
  %1222 = vmatpush.msra.mxu0 0.0
  %1223 = vmatpush.msra.mxu0 0.0
  %1224 = vmatpush.msra.mxu0 0.0
  %1225 = vmatpush.msra.mxu0 0.0
  %1226 = vmatpush.msra.mxu0 %v1204
  %1227 = vmatpush.msra.mxu0 %v1203
  %1228 = vmatpush.msra.mxu0 %v1202
  %1229 = vmatpush.msra.mxu0 %v1201
  %1230 = vmatmul.f32.gmra.mxu0 %v763
  %v1231 = vpop.f32.mrf.mxu0
  %v1232 = vadd.f32 %v1207, %v1231
  %1233 = vmatmul.f32.gmra.mxu0 %v826
  %v1234 = vpop.f32.mrf.mxu0
  %v1235 = vadd.f32 %v1207, %v1234
  %1236 = vmatmul.f32.gmra.mxu0 %v889
  %v1237 = vpop.f32.mrf.mxu0
  %v1238 = vadd.f32 %v1207, %v1237
  %1239 = vmatmul.f32.gmra.mxu0 %v952
  %v1240 = vpop.f32.mrf.mxu0
  %v1241 = vadd.f32 %v1207, %v1240
  %1242 = vmatmul.f32.gmra.mxu0 %v1015
  %v1243 = vpop.f32.mrf.mxu0
  %v1244 = vadd.f32 %v1207, %v1243
  %1245 = vmatmul.f32.gmra.mxu0 %v1078
  %v1246 = vpop.f32.mrf.mxu0
  %v1247 = vadd.f32 %v1207, %v1246
  %1248 = vmatmul.f32.gmra.mxu0 %v1141
  %v1249 = vpop.f32.mrf.mxu0
  %v1250 = vadd.f32 %v1207, %v1249
  %1251 = vmatmul.f32.gmra.mxu0 %v1212
  %v1252 = vpop.f32.mrf.mxu0
  %v1253 = vadd.f32 %v1207, %v1252
  %1254 = vdwg.mxu0
  %1255 = vst [vmem:[%s13] sm:$0xff] %v1232
  %1256 = vst [vmem:[%s13 + $0x8] sm:$0xff] %v1235
  %1257 = vst [vmem:[%s13 + $0x10] sm:$0xff] %v1238
  %1258 = vst [vmem:[%s13 + $0x18] sm:$0xff] %v1241
  %1259 = vst [vmem:[%s13 + $0x20] sm:$0xff] %v1244
  %1260 = vst [vmem:[%s13 + $0x28] sm:$0xff] %v1247
  %1261 = vst [vmem:[%s13 + $0x30] sm:$0xff] %v1250
  %1262 = vst [vmem:[%s13 + $0x38] sm:$0xff] %v1253
  // Predicated region
  $region54: #{decoder_forward.1} parent=0 // pred_check
    _
  $region55: #{decoder_forward.1} parent=0 // pred_check_branch
    %1264 = sbr.rel (0) target = $region57
  $region56: #{decoder_forward.1} parent=0 // pred_region
    _
  $region57: #{decoder_forward.1} parent=0 // pred_fallthru
    _
  // Predicated region
  $region58: #{decoder_forward.1} parent=0 // pred_check
    _
  $region59: #{decoder_forward.1} parent=0 // pred_check_branch
    %1266 = sbr.rel (0) target = $region61
  $region60: #{decoder_forward.1} parent=0 // pred_region
    _
  $region61: #{decoder_forward.1} parent=0 // pred_fallthru
    _

</llo_original>
